<compile_context>
chip_gen: v5e
topology: v5e:2x2
jax: 0.10.0
libtpu: 0.0.40
codegen_flags: <defaults>
</compile_context>

<pallas_src>
import functools

import jax
import jax.numpy as jnp
from jax import lax
from jax.experimental import pallas as pl
from jax.experimental.pallas import tpu as pltpu

_VMEM_LIMIT = 32 * 1024 * 1024


def _pad_and_tile(n, max_tile):
    """Pad n up so it splits into whole tiles; returns (n_pad, tile).

    n_pad % tile == 0 and tile % 8 == 0; never falls back to a single
    un-pipelined whole-array block for awkward n.
    """
    if n <= max_tile:
        n_pad = ((n + 7) // 8) * 8
        return n_pad, n_pad
    n_pad = ((n + 255) // 256) * 256
    tile = 256
    t = 512
    while t <= max_tile:
        if n_pad % t == 0:
            tile = t
        t += 256
    return n_pad, tile


# ----------------------------------------------------------------------------
# Pallas kernels
# ----------------------------------------------------------------------------
def _sim_core(a, y, temp, lo, hi, x_ref, pt_ref, pstats_ref):
    """Shared prototype/pixel similarity math.

    x (T, C) bf16; pt (C, Ppad) bf16 (pre-transposed prototypes);
    pstats (2, Ppad) f32 = [||p||^2, 1/||p||].
    Softmax runs over prototype columns in (lo, hi) (exclusive / exclusive).
    Returns (cos, sim_valid, softmax, col_iota, sim0).
    """
    x = x_ref[...]                                   # (T, C)  bf16
    xf = x.astype(jnp.float32)
    ps = pstats_ref[...]                             # (2, Pp) f32
    psq = ps[0:1, :]                                 # ||p||^2
    p_rn = ps[1:2, :]                                # 1/||p||

    c_inv = 1.0 / float(x.shape[-1])
    xsq = jnp.sum(xf * xf, axis=-1, keepdims=True)   # (T, 1)
    x_rn = lax.rsqrt(jnp.maximum(xsq, 1e-24))

    # one bf16 MXU matmul reused for cosine AND the RMS distance
    raw = lax.dot_general(x, pt_ref[...], (((1,), (0,)), ((), ())),
                          preferred_element_type=jnp.float32)        # (T, Pp)
    cos = raw * x_rn * p_rn
    dist = jnp.sqrt(jnp.maximum(xsq + psq - 2.0 * raw, 0.0) * c_inv)
    sigma = 1.0 - jnp.tanh((0.5 * y) * dist)         # == 2/(1+exp(y*dist))
    sim = cos + sigma * a

    col = lax.broadcasted_iota(jnp.int32, sim.shape, 1)
    valid = (col > lo) & (col < hi)
    z = jnp.where(valid, sim * temp, jnp.float32(-1e30))
    z = z - jnp.max(z, axis=-1, keepdims=True)
    e = jnp.where(valid, jnp.exp(z), jnp.float32(0.0))
    denom = jnp.maximum(jnp.sum(e, axis=-1, keepdims=True), 1e-30)
    sm = e * pl.reciprocal(denom, approx=True)

    sim_v = jnp.where(valid, sim, jnp.float32(0.0))
    sim0 = jnp.sum(sim_v * sm, axis=-1, keepdims=True)               # (T, 1)
    return cos, sim_v, sm, col, sim0


def _proto_match_kernel(scal_f, scal_i, x_ref, pt_ref, p_ref, pstats_ref,
                        matched_ref, aux_ref):
    """Full prototype matching (used by match_pts).

    scal_f = [a, y, temp] (SMEM), scal_i = [split, hi] (SMEM).
    Softmax over prototype rows (split, hi); one_sim = cosine column `split`.
    Outputs: matched (T, C) f32, aux (T, 8) f32 lanes [sim0, sim1, one_sim, 0..].
    """
    a, y, temp = scal_f[0], scal_f[1], scal_f[2]
    split, hi = scal_i[0], scal_i[1]

    cos, sim_v, sm, col, sim0 = _sim_core(a, y, temp, split, hi,
                                          x_ref, pt_ref, pstats_ref)
    sim1 = jnp.sum(sim_v, axis=-1, keepdims=True)
    one_sim = jnp.sum(jnp.where(col == split, cos, 0.0),
                      axis=-1, keepdims=True)

    # bf16 MXU aggregation of prototypes with the softmax weights
    matched_ref[...] = lax.dot_general(sm.astype(jnp.bfloat16), p_ref[...],
                                       (((1,), (0,)), ((), ())),
                                       preferred_element_type=jnp.float32)
    lane = lax.broadcasted_iota(jnp.int32, aux_ref.shape, 1)
    aux_ref[...] = (jnp.where(lane == 0, sim0, 0.0)
                    + jnp.where(lane == 1, sim1, 0.0)
                    + jnp.where(lane == 2, one_sim, 0.0))


def _proto_mask_kernel(scal_f, scal_i, x_ref, pt_ref, pstats_ref, aux_ref):
    """sim-only variant (used by get_qry_masks): no matched output / matmul."""
    a, y, temp = scal_f[0], scal_f[1], scal_f[2]
    hi = scal_i[0]
    _, _, _, _, sim0 = _sim_core(a, y, temp, jnp.int32(-1), hi,
                                 x_ref, pt_ref, pstats_ref)
    lane = lax.broadcasted_iota(jnp.int32, aux_ref.shape, 1)
    aux_ref[...] = jnp.where(lane == 0, sim0, 0.0)


def _proto_stats(pts):
    """Shared prototype preprocessing: bf16 casts + norms (grid-invariant)."""
    pts_b = pts.astype(jnp.bfloat16)
    pts_t = pts_b.T                                   # (C, Ppad), avoids vxpose
    pf = pts_b.astype(jnp.float32)
    psq = jnp.sum(pf * pf, axis=-1)
    prn = lax.rsqrt(jnp.maximum(psq, 1e-24))
    return pts_b, pts_t, jnp.stack([psq, prn], axis=0)


def proto_match(x, pts, a, y, temp, split, hi):
    """x (HW, C); pts (Ppad, C) f32 (Ppad % 128 == 0); split/hi i32 scalars.

    Returns (matched (HW, C) f32, aux (HW, 8) f32 [sim0, sim1, one_sim, ...]).
    """
    HW, C = x.shape
    Ppad = int(pts.shape[0])
    assert Ppad % 128 == 0
    pts_b, pts_t, pstats = _proto_stats(pts)
    scal_f = jnp.stack([jnp.float32(a), jnp.float32(y),
                        jnp.asarray(temp, jnp.float32)])
    scal_i = jnp.stack([jnp.asarray(split, jnp.int32),
                        jnp.asarray(hi, jnp.int32)])
    HWp, tile = _pad_and_tile(HW, 2048)
    xb = x.astype(jnp.bfloat16)
    if HWp != HW:
        xb = jnp.pad(xb, ((0, HWp - HW), (0, 0)))
    matched, aux = pl.pallas_call(
        _proto_match_kernel,
        out_shape=(jax.ShapeDtypeStruct((HWp, C), jnp.float32),
                   jax.ShapeDtypeStruct((HWp, 8), jnp.float32)),
        grid_spec=pltpu.PrefetchScalarGridSpec(
            num_scalar_prefetch=2,
            grid=(HWp // tile,),
            in_specs=[pl.BlockSpec((tile, C), lambda i, sf, si: (i, 0)),
                      pl.BlockSpec((C, Ppad), lambda i, sf, si: (0, 0)),
                      pl.BlockSpec((Ppad, C), lambda i, sf, si: (0, 0)),
                      pl.BlockSpec((2, Ppad), lambda i, sf, si: (0, 0))],
            out_specs=(pl.BlockSpec((tile, C), lambda i, sf, si: (i, 0)),
                       pl.BlockSpec((tile, 8), lambda i, sf, si: (i, 0)))),
        compiler_params=pltpu.CompilerParams(
            dimension_semantics=("parallel",),
            vmem_limit_bytes=_VMEM_LIMIT),
    )(scal_f, scal_i, xb, pts_t, pts_b, pstats)
    return matched[:HW], aux[:HW]


def proto_mask_sim(x, pts, a, y, temp, hi):
    """sim-only pass: returns aux (HW, 8) f32 with lane 0 = sim0."""
    HW, C = x.shape
    Ppad = int(pts.shape[0])
    assert Ppad % 128 == 0
    _, pts_t, pstats = _proto_stats(pts)
    scal_f = jnp.stack([jnp.float32(a), jnp.float32(y),
                        jnp.asarray(temp, jnp.float32)])
    scal_i = jnp.asarray(hi, jnp.int32).reshape(1)
    HWp, tile = _pad_and_tile(HW, 2048)
    xb = x.astype(jnp.bfloat16)
    if HWp != HW:
        xb = jnp.pad(xb, ((0, HWp - HW), (0, 0)))
    aux = pl.pallas_call(
        _proto_mask_kernel,
        out_shape=jax.ShapeDtypeStruct((HWp, 8), jnp.float32),
        grid_spec=pltpu.PrefetchScalarGridSpec(
            num_scalar_prefetch=2,
            grid=(HWp // tile,),
            in_specs=[pl.BlockSpec((tile, C), lambda i, sf, si: (i, 0)),
                      pl.BlockSpec((C, Ppad), lambda i, sf, si: (0, 0)),
                      pl.BlockSpec((2, Ppad), lambda i, sf, si: (0, 0))],
            out_specs=pl.BlockSpec((tile, 8), lambda i, sf, si: (i, 0))),
        compiler_params=pltpu.CompilerParams(
            dimension_semantics=("parallel",),
            vmem_limit_bytes=_VMEM_LIMIT),
    )(scal_f, scal_i, xb, pts_t, pstats)
    return aux[:HW]


def _flash_attn_kernel(q_ref, k_ref, v_ref, o_ref, m_sc, l_sc, acc_sc, *,
                       kv_valid):
    """Residual flash attention: o = q + softmax(q k^T) v (k pre-scaled)."""
    kv = pl.program_id(2)

    @pl.when(kv == 0)
    def _():
        m_sc[...] = jnp.full(m_sc.shape, -1e30, jnp.float32)
        l_sc[...] = jnp.zeros(l_sc.shape, jnp.float32)
        acc_sc[...] = jnp.zeros(acc_sc.shape, jnp.float32)

    q = q_ref[0]                                      # (tq, C) bf16
    k = k_ref[0]                                      # (tk, C) bf16 (pre-scaled)
    v = v_ref[0]
    s = lax.dot_general(q, k, (((1,), (1,)), ((), ())),
                        preferred_element_type=jnp.float32)          # (tq, tk)
    if kv_valid is not None:                          # mask padded kv columns
        col = kv * k.shape[0] + lax.broadcasted_iota(jnp.int32, s.shape, 1)
        s = jnp.where(col < kv_valid, s, jnp.float32(-1e30))

    m_prev = m_sc[...]
    m_new = jnp.maximum(m_prev, jnp.max(s, axis=-1, keepdims=True))
    alpha = jnp.exp(m_prev - m_new)
    p = jnp.exp(s - m_new)
    l_sc[...] = alpha * l_sc[...] + jnp.sum(p, axis=-1, keepdims=True)
    acc_sc[...] = alpha * acc_sc[...] + lax.dot_general(
        p.astype(v.dtype), v, (((1,), (0,)), ((), ())),
        preferred_element_type=jnp.float32)
    m_sc[...] = m_new

    @pl.when(kv == pl.num_programs(2) - 1)
    def _():
        o_ref[0] = (q.astype(jnp.float32)
                    + acc_sc[...] * pl.reciprocal(l_sc[...], approx=True)
                    ).astype(o_ref.dtype)


def cross_attn_batched(q, k, v):
    """Batched residual aggregation: q + softmax(q k^T / sqrt(C)) v.

    q, k, v: (B, HW, C) f32.  The batch axis is a 'parallel' grid axis so the
    B independent problems shard across cores / amortize launch overhead.
    """
    B, HW, C = q.shape
    scale = 1.0 / float(C) ** 0.5
    qb = q.astype(jnp.bfloat16)
    kb = (k * scale).astype(jnp.bfloat16)             # fold scale into k once
    vb = v.astype(jnp.bfloat16)
    HWp, tq = _pad_and_tile(HW, 1024)
    tk = tq
    kv_valid = None
    if HWp != HW:
        pad = ((0, 0), (0, HWp - HW), (0, 0))
        qb, kb, vb = jnp.pad(qb, pad), jnp.pad(kb, pad), jnp.pad(vb, pad)
        kv_valid = HW
    out = pl.pallas_call(
        functools.partial(_flash_attn_kernel, kv_valid=kv_valid),
        out_shape=jax.ShapeDtypeStruct((B, HWp, C), jnp.float32),
        grid=(B, HWp // tq, HWp // tk),
        in_specs=[pl.BlockSpec((1, tq, C), lambda b, i, j: (b, i, 0)),
                  pl.BlockSpec((1, tk, C), lambda b, i, j: (b, j, 0)),
                  pl.BlockSpec((1, tk, C), lambda b, i, j: (b, j, 0))],
        out_specs=pl.BlockSpec((1, tq, C), lambda b, i, j: (b, i, 0)),
        scratch_shapes=[pltpu.VMEM((tq, 1), jnp.float32),
                        pltpu.VMEM((tq, 1), jnp.float32),
                        pltpu.VMEM((tq, C), jnp.float32)],
        compiler_params=pltpu.CompilerParams(
            dimension_semantics=("parallel", "parallel", "arbitrary"),
            vmem_limit_bytes=_VMEM_LIMIT),
    )(qb, kb, vb)
    return out[:, :HW]


# ----------------------------------------------------------------------------
# Plain-JAX glue
# ----------------------------------------------------------------------------
def bilinear_nhwc(x, size):
    """F.interpolate(..., mode='bilinear', align_corners=True) for NHWC."""
    x = jnp.asarray(x, jnp.float32)
    N, H, W, C = x.shape
    oh, ow = int(size[0]), int(size[1])

    def coords(inn, outn):
        if outn == 1 or inn == 1:
            return jnp.zeros((outn,), jnp.float32)
        return jnp.arange(outn, dtype=jnp.float32) * ((inn - 1) / (outn - 1))

    ys, xs = coords(H, oh), coords(W, ow)
    y0 = jnp.floor(ys).astype(jnp.int32)
    y1 = jnp.minimum(y0 + 1, H - 1)
    x0 = jnp.floor(xs).astype(jnp.int32)
    x1 = jnp.minimum(x0 + 1, W - 1)
    wy = (ys - y0.astype(jnp.float32))[None, :, None, None]
    wx = (xs - x0.astype(jnp.float32))[None, None, :, None]
    top = x[:, y0, :, :] * (1 - wy) + x[:, y1, :, :] * wy
    return top[:, :, x0, :] * (1 - wx) + top[:, :, x1, :] * wx


class FewShotSegPallas:
    def __init__(self, feat_channels=128, seed=42):
        C = feat_channels
        self.C = C
        self.scaler = 10.0
        self.rate = 0.95
        self.kernel = (16, 16)
        self.stride = 8
        self.y = 3.5
        self.a = 0.5
        self.beta1 = 0.5
        self.beta2 = 0.5
        key = jax.random.PRNGKey(seed)
        k1, k2, k3 = jax.random.split(key, 3)
        # TODO(synk): Res101Encoder definition unavailable -- deterministic strided-conv stand-in.
        self.enc_w = 0.1 * jax.random.normal(k1, (C, 3, 3, 3), jnp.float32)
        self.enc_b = jnp.zeros((C,), jnp.float32)
        # nn.Linear(1, 1)
        self.fc_w = jnp.float32(0.7)
        self.fc_b = jnp.float32(0.1)
        # TODO(synk): Decoder definition unavailable -- 1x1-conv stand-in to a single channel.
        self.dec1_w = 0.05 * jax.random.normal(k2, (1, 2 * C + 3), jnp.float32)
        self.dec1_b = jnp.zeros((1,), jnp.float32)
        self.dec2_w = 0.05 * jax.random.normal(k3, (1, 2 * C + 3), jnp.float32)
        self.dec2_b = jnp.zeros((1,), jnp.float32)

    # -------------------- submodule stand-ins --------------------
    def encoder(self, imgs):
        feats = lax.conv_general_dilated(
            imgs, self.enc_w, window_strides=(2, 2), padding="SAME",
            dimension_numbers=("NCHW", "OIHW", "NCHW"))
        feats = jnp.tanh(feats + self.enc_b[None, :, None, None])
        # deterministic surrogate for the encoder's threshold head tao: (N_imgs, 2)
        tao = jnp.stack([jnp.tanh(feats.mean(axis=(1, 2, 3))),
                         0.5 * jnp.tanh(feats.std(axis=(1, 2, 3)))], axis=-1)
        return feats, tao

    def _decoder(self, x, w, b):
        # channels-last 1x1-conv stand-in: (n, h, w, 2C+3) -> (n, h, w, 1)
        return jnp.einsum("nhwc,oc->nhwo", x, w) + b[None, None, None, :]

    # -------------------- module methods --------------------
    def get_masked_fts(self, fts, mask):
        # fts (1, h, w, C); mask (h, w, 1)
        m = mask[None, ...]
        return jnp.sum(fts * m, axis=(1, 2)) / (jnp.sum(m, axis=(1, 2)) + 1e-5)

    @staticmethod
    def _proto_pad(n_patches):
        pmax = 1 + max(min(n_patches, 150), 100)
        return max(128, ((pmax + 127) // 128) * 128)

    def scan_device(self, fts, mask, flag_fg):
        """On-device replacement for the reference F.unfold prototype scan.

        fts (1,H,W,C) f32, mask (1,H,W) {0,1} f32, flag_fg traced bool scalar.
        Returns (bg_pts (Ppad,C), bg_hi, fg_pts (Ppad,C), fg_hi): rows [0, hi)
        are valid -- row 0 = global prototype, rows 1.. = packed region protos.
        """
        kh, kw = self.kernel
        stride = self.stride
        _, H, W, C = fts.shape
        m = mask[..., None]
        n_fg = jnp.sum(mask)
        n_bg = float(H * W) - n_fg
        glob_fg = jnp.sum(fts * m, axis=(0, 1, 2)) / (n_fg + 1e-5)        # (C,)
        glob_bg = jnp.sum(fts * (1.0 - m), axis=(0, 1, 2)) / (n_bg + 1e-5)

        def pool(xx):                                   # sum-pooling == unfold sums
            return lax.reduce_window(xx, 0.0, lax.add,
                                     (1, kh, kw, 1), (1, stride, stride, 1),
                                     "VALID")

        fg_sum = pool(fts * m).reshape(-1, C)           # (L, C), row-major patches
        bg_sum = pool(fts * (1.0 - m)).reshape(-1, C)
        msum = pool(m).reshape(-1)                      # (L,)
        bsum = float(kh * kw) - msum
        L = int(fg_sum.shape[0])
        fg_proto = fg_sum / (msum[:, None] + 1e-5)
        bg_proto = bg_sum / (bsum[:, None] + 1e-5)
        fg_keep = (msum >= jnp.minimum(kh * kw * self.rate, n_fg / 100.0)) & flag_fg
        bg_keep = bsum >= jnp.minimum(float(kh * kw), n_bg / 100.0)

        Ppad = self._proto_pad(L)
        flat_fts = fts.reshape(-1, C)
        flat_m = mask.reshape(-1)

        def pack(protos, keep, cap):
            # pack the first `cap` kept rows into rows 1..cap of a (Ppad, C) slab
            keep_i = keep.astype(jnp.int32)
            rank = jnp.cumsum(keep_i)                   # 1-based among kept
            sel = keep & (rank <= cap)
            dest = jnp.where(sel, rank, Ppad)           # row Ppad = dump row
            out = jnp.zeros((Ppad + 1, C), jnp.float32).at[dest].add(
                jnp.where(sel[:, None], protos, 0.0))
            return out[:Ppad], jnp.minimum(jnp.sum(keep_i), cap), jnp.sum(keep_i)

        # TODO(synk): reference caps via random.sample; deterministic first-N here.
        fg_pack, fg_cnt, fg_nsel = pack(fg_proto, fg_keep, 150)
        bg_pack, bg_cnt, bg_nsel = pack(bg_proto, bg_keep, 150)
        fg_fb, fg_fb_cnt, _ = pack(flat_fts, flat_m > 0.5, 100)   # get_pts(fts, mask)
        bg_fb, bg_fb_cnt, _ = pack(flat_fts, flat_m < 0.5, 100)   # get_pts(fts, 1-mask)

        use_fb_fg = (fg_nsel == 0) & flag_fg
        use_fb_bg = bg_nsel == 0
        fg_rows = jnp.where(use_fb_fg, fg_fb, fg_pack)
        bg_rows = jnp.where(use_fb_bg, bg_fb, bg_pack)
        fg_cnt = jnp.where(flag_fg, jnp.where(use_fb_fg, fg_fb_cnt, fg_cnt), 0)
        bg_cnt = jnp.where(use_fb_bg, bg_fb_cnt, bg_cnt)
        fg_pts = fg_rows.at[0].set(glob_fg)
        bg_pts = bg_rows.at[0].set(glob_bg)
        return (bg_pts, (bg_cnt + 1).astype(jnp.int32),
                fg_pts, (fg_cnt + 1).astype(jnp.int32))

    def get_qry_masks(self, pts, hi, qry_fts, t):
        # pts (Ppad, C) padded, rows [0, hi) valid; qry_fts (n, h, w, C)
        n, h, w, C = qry_fts.shape
        masks = []
        for i in range(n):
            x = qry_fts[i].reshape(h * w, C)
            temp = 1.0 + self.scaler * jax.nn.sigmoid(self.thresh_pred1[i, 0])
            aux = proto_mask_sim(x, pts, self.a, self.y, temp, hi)
            sim_soft = aux[:, 0] * self.scaler
            pm = jax.nn.sigmoid(sim_soft - t[0])
            # argmax([1-pm, pm], dim=0) == (pm > 0.5)
            masks.append((pm > 0.5).astype(jnp.float32).reshape(1, h, w, 1))
        return jnp.concatenate(masks, axis=0)

    def match_pts(self, pts, hi, qry_fts, qry_mask, thresh_pred):
        # pts (Ppad, C) padded, rows [0, hi) valid; qry_fts (n, h, w, C)
        n, h, w, C = qry_fts.shape
        res = []
        for i in range(n):
            qry_ft = qry_fts[i:i + 1]
            qry_proto = self.get_masked_fts(qry_ft, qry_mask[i])          # (1, C)
            pts = pts + jax.nn.sigmoid(thresh_pred[i]) * qry_proto
            x = qry_ft[0].reshape(h * w, C)
            temp = 1.0 + self.scaler * jax.nn.sigmoid(self.thresh_pred1[i, 0])
            # Row i is the split-off prototype (its cosine column is one_sim);
            # rows (i, hi) participate in the softmax -- all inside the kernel.
            matched, aux = proto_match(x, pts, self.a, self.y, temp,
                                       split=i, hi=hi)
            mf = jnp.concatenate([x, matched, aux[:, 0:3]], axis=-1)      # (HW, 2C+3)
            res.append(mf.reshape(1, h, w, 2 * C + 3))
        return jnp.concatenate(res, axis=0)

    def get_qry_fts_fg_bg(self, qry_fts, sup_fts, mask, qry_fg_masks, qry_bg_masks):
        """Fused fg+bg query aggregation: all 4*n attention problems in one call."""
        # TODO(synk): InfoAggregation definition unavailable -- residual cross-attention stand-in.
        n, h, w, C = qry_fts.shape
        HW = h * w
        mask_r = bilinear_nhwc(mask[..., None], sup_fts.shape[1:3])
        sup_flat = jnp.broadcast_to(sup_fts.reshape(1, HW, C), (n, HW, C))
        sup_fg = jnp.broadcast_to((sup_fts * mask_r).reshape(1, HW, C), (n, HW, C))
        sup_bg = jnp.broadcast_to((sup_fts * (1 - mask_r)).reshape(1, HW, C), (n, HW, C))
        q_all = qry_fts.reshape(n, HW, C)
        k_self_fg = (qry_fts * qry_fg_masks).reshape(n, HW, C)
        k_self_bg = (qry_fts * qry_bg_masks).reshape(n, HW, C)

        qB = jnp.concatenate([q_all, q_all, q_all, q_all], axis=0)
        kB = jnp.concatenate([k_self_fg, sup_fg, k_self_bg, sup_bg], axis=0)
        vB = jnp.concatenate([q_all, sup_flat, q_all, sup_flat], axis=0)
        att = cross_attn_batched(qB, kB, vB)                       # (4n, HW, C)
        self_fg, cross_fg = att[0:n], att[n:2 * n]
        self_bg, cross_bg = att[2 * n:3 * n], att[3 * n:4 * n]
        fg = (self_fg * 0.5 + cross_fg * self.beta1) / (0.5 + self.beta1)
        bg = (self_bg * 0.5 + cross_bg * self.beta2) / (0.5 + self.beta2)
        return fg.reshape(n, h, w, C), bg.reshape(n, h, w, C)

    # -------------------- forward --------------------
    def forward(self, supp_imgs, supp_mask, qry_imgs, train=False):
        self.n_ways = len(supp_imgs)
        self.n_shots = len(supp_imgs[0])
        self.n_queries = len(qry_imgs)
        assert self.n_ways == 1 and self.n_queries == 1
        qry_bs = qry_imgs[0].shape[0]
        supp_bs = supp_imgs[0][0].shape[0]
        img_size = supp_imgs[0][0].shape[-2:]
        supp_mask = jnp.stack([jnp.stack(way, axis=0) for way in supp_mask], axis=0)
        supp_mask = supp_mask.reshape(supp_bs, self.n_ways, self.n_shots, *img_size)
        imgs_concat = jnp.concatenate(
            [jnp.concatenate(way, axis=0) for way in supp_imgs]
            + [jnp.concatenate(qry_imgs, axis=0)], axis=0)
        img_fts_nchw, tao = self.encoder(imgs_concat)
        # single transpose to channels-last; everything downstream stays NHWC
        img_fts = jnp.transpose(img_fts_nchw, (0, 2, 3, 1))
        fh, fw = img_fts.shape[1:3]
        n_sup = self.n_ways * self.n_shots * supp_bs
        supp_fts = img_fts[:n_sup].reshape(supp_bs, self.n_ways, self.n_shots, fh, fw, self.C)
        qry_fts = img_fts[n_sup:].reshape(qry_bs, self.n_queries, fh, fw, self.C)
        self.thresh_pred1 = tao[1:]                                      # (n_q, 2)
        self.thresh_pred2 = self.thresh_pred1[:, 1:2] * self.fc_w + self.fc_b
        self.t = tao[0]                                                  # (2,)

        align_loss = jnp.zeros((1,), jnp.float32)
        outputs = []
        for epi in range(supp_bs):
            supp_fts_ = [[bilinear_nhwc(supp_fts[epi:epi + 1, way, shot], img_size)
                          for shot in range(self.n_shots)] for way in range(self.n_ways)]
            flag_fg = jnp.sum(supp_mask[epi][0]) > 0                   # stays on-device
            region = [[self.scan_device(supp_fts_[way][shot],
                                        supp_mask[epi:epi + 1, way, shot], flag_fg)
                       for shot in range(self.n_shots)]
                      for way in range(self.n_ways)]
            bg_pts = [region[w][0][0] for w in range(self.n_ways)]
            bg_hi = [region[w][0][1] for w in range(self.n_ways)]
            fg_pts = [region[w][0][2] for w in range(self.n_ways)]
            fg_hi = [region[w][0][3] for w in range(self.n_ways)]
            qry_bg_masks = [self.get_qry_masks(bg_pts[w], bg_hi[w], qry_fts[epi], self.t[0:1])
                            for w in range(self.n_ways)]
            qry_fg_masks = [self.get_qry_masks(fg_pts[w], fg_hi[w], qry_fts[epi], self.t[1:2])
                            for w in range(self.n_ways)]
            qry_bg_masks_ = [qry_bg_masks[w] * (1 - qry_fg_masks[w]) for w in range(self.n_ways)]
            qry_fg_masks_ = [qry_fg_masks[w] * (1 - qry_bg_masks[w]) for w in range(self.n_ways)]
            qry_fg_fts, qry_bg_fts = self.get_qry_fts_fg_bg(
                qry_fts[epi], supp_fts[epi:epi + 1, 0, 0],
                supp_mask[epi:epi + 1, 0, 0], qry_fg_masks_[0], qry_bg_masks_[0])
            matched_fts = jnp.stack(
                [self.match_pts(fg_pts[w], fg_hi[w], qry_fg_fts, qry_fg_masks_[w],
                                self.thresh_pred1[:, 1:2])
                 for w in range(self.n_ways)], axis=1)
            fg_preds = jnp.concatenate(
                [self._decoder(matched_fts[:, w], self.dec1_w, self.dec1_b)
                 for w in range(self.n_ways)], axis=-1)
            bg_matched_fts = jnp.stack(
                [self.match_pts(bg_pts[w], bg_hi[w], qry_bg_fts, qry_bg_masks_[w],
                                self.thresh_pred2)
                 for w in range(self.n_ways)], axis=1)
            bg_preds = jnp.concatenate(
                [self._decoder(bg_matched_fts[:, w], self.dec2_w, self.dec2_b)
                 for w in range(self.n_ways)], axis=-1)
            fg_preds = bilinear_nhwc(fg_preds, img_size)
            bg_preds = bilinear_nhwc(bg_preds, img_size)
            preds = jnp.concatenate([bg_preds, fg_preds], axis=-1)        # (n, H, W, 2)
            preds = jax.nn.softmax(preds, axis=-1)
            preds = jnp.transpose(preds, (0, 3, 1, 2))                    # NCHW for the caller
            outputs.append(preds)
            # TODO(synk): prototype-alignment loss (train=True path, NLLLoss) not implemented.
        output = jnp.stack(outputs, axis=1)
        output = output.reshape(-1, *output.shape[2:])
        return output, align_loss / supp_bs


if __name__ == "__main__":
    key = jax.random.PRNGKey(0)
    k1, k2 = jax.random.split(key)
    H = W = 32
    supp_img = jax.random.normal(k1, (1, 3, H, W), jnp.float32)
    qry_img = jax.random.normal(k2, (1, 3, H, W), jnp.float32)
    fore_mask = jnp.zeros((1, H, W), jnp.float32).at[:, 8:24, 8:24].set(1.0)

    model = FewShotSegPallas(feat_channels=128, seed=42)
    out, loss = model.forward([[supp_img]], [[fore_mask]], [qry_img], train=False)
    out = jax.block_until_ready(out)
    loss = jax.block_until_ready(loss)
    assert out.shape == (1, 2, H, W), out.shape
    assert bool(jnp.all(jnp.isfinite(out)))
    print("KERNEL_OK")
</pallas_src>

<mosaic_0001>
module attributes {stable_mosaic.version = 11 : i64} {
  func.func @_proto_mask_kernel(%arg0: i32, %arg1: memref<3xf32, #tpu.memory_space<smem>>, %arg2: memref<1xi32, #tpu.memory_space<smem>>, %arg3: memref<256x128xbf16, #tpu.memory_space<vmem>>, %arg4: memref<128x128xbf16, #tpu.memory_space<vmem>>, %arg5: memref<2x128xf32, #tpu.memory_space<vmem>>, %arg6: memref<256x8xf32, #tpu.memory_space<vmem>>) attributes {dimension_semantics = [#tpu.dimension_semantics<parallel>], iteration_bounds = array<i64: 1>, scalar_prefetch = 2 : i64, scratch_operands = 0 : i64, tpu.core_type = #tpu.core_type<tc>, window_params = [{transform_indices = @transform_0, window_bounds = array<i64: 256, 128>}, {pipeline_mode = #tpu.pipeline_mode<synchronous>, transform_indices = @transform_1, window_bounds = array<i64: 128, 128>}, {pipeline_mode = #tpu.pipeline_mode<synchronous>, transform_indices = @transform_2, window_bounds = array<i64: 2, 128>}, {transform_indices = @transform_3, window_bounds = array<i64: 256, 8>}]} {
    %c0 = arith.constant 0 : index
    %0 = memref.load %arg1[%c0] : memref<3xf32, #tpu.memory_space<smem>>
    %c1 = arith.constant 1 : index
    %1 = memref.load %arg1[%c1] : memref<3xf32, #tpu.memory_space<smem>>
    %c2 = arith.constant 2 : index
    %2 = memref.load %arg1[%c2] : memref<3xf32, #tpu.memory_space<smem>>
    %c0_0 = arith.constant 0 : index
    %3 = memref.load %arg2[%c0_0] : memref<1xi32, #tpu.memory_space<smem>>
    %c0_1 = arith.constant 0 : index
    %c0_2 = arith.constant 0 : index
    %4 = vector.load %arg3[%c0_1, %c0_2] : memref<256x128xbf16, #tpu.memory_space<vmem>>, vector<256x128xbf16>
    %5 = arith.extf %4 : vector<256x128xbf16> to vector<256x128xf32>
    %c0_3 = arith.constant 0 : index
    %c0_4 = arith.constant 0 : index
    %6 = vector.load %arg5[%c0_3, %c0_4] : memref<2x128xf32, #tpu.memory_space<vmem>>, vector<2x128xf32>
    %7 = vector.extract_strided_slice %6 {offsets = [0, 0], sizes = [1, 128], strides = [1, 1]} : vector<2x128xf32> to vector<1x128xf32>
    %8 = vector.extract_strided_slice %6 {offsets = [1, 0], sizes = [1, 128], strides = [1, 1]} : vector<2x128xf32> to vector<1x128xf32>
    %9 = arith.mulf %5, %5 : vector<256x128xf32>
    %cst = arith.constant dense<0.000000e+00> : vector<256xf32>
    %10 = vector.multi_reduction <add>, %9, %cst [1] : vector<256x128xf32> to vector<256xf32>
    %11 = vector.shape_cast %10 : vector<256xf32> to vector<256x1xf32>
    %cst_5 = arith.constant 1.000000e-24 : f32
    %12 = vector.broadcast %cst_5 : f32 to vector<256x1xf32>
    %13 = arith.maximumf %11, %12 : vector<256x1xf32>
    %14 = math.rsqrt %13 : vector<256x1xf32>
    %c0_6 = arith.constant 0 : index
    %c0_7 = arith.constant 0 : index
    %15 = vector.load %arg4[%c0_6, %c0_7] : memref<128x128xbf16, #tpu.memory_space<vmem>>, vector<128x128xbf16>
    %cst_8 = arith.constant dense<0.000000e+00> : vector<256x128xf32>
    %16 = tpu.matmul %4, %15, %cst_8 {dimension_numbers = #tpu.dot_dimension_numbers<[1], [0], [0], [1], [0, 0, 1, 1], [], []>} : vector<256x128xbf16>, vector<128x128xbf16>, vector<256x128xf32> -> vector<256x128xf32>
    %17 = vector.broadcast %14 : vector<256x1xf32> to vector<256x128xf32>
    %18 = arith.mulf %16, %17 : vector<256x128xf32>
    %19 = vector.broadcast %8 : vector<1x128xf32> to vector<256x128xf32>
    %20 = arith.mulf %18, %19 : vector<256x128xf32>
    %21 = vector.broadcast %11 : vector<256x1xf32> to vector<256x128xf32>
    %22 = vector.broadcast %7 : vector<1x128xf32> to vector<256x128xf32>
    %23 = arith.addf %21, %22 : vector<256x128xf32>
    %cst_9 = arith.constant 2.000000e+00 : f32
    %24 = vector.broadcast %cst_9 : f32 to vector<256x128xf32>
    %25 = arith.mulf %24, %16 : vector<256x128xf32>
    %26 = arith.subf %23, %25 : vector<256x128xf32>
    %cst_10 = arith.constant 0.000000e+00 : f32
    %27 = vector.broadcast %cst_10 : f32 to vector<256x128xf32>
    %28 = arith.maximumf %26, %27 : vector<256x128xf32>
    %cst_11 = arith.constant 7.812500e-03 : f32
    %29 = vector.broadcast %cst_11 : f32 to vector<256x128xf32>
    %30 = arith.mulf %28, %29 : vector<256x128xf32>
    %31 = math.sqrt %30 : vector<256x128xf32>
    %cst_12 = arith.constant 5.000000e-01 : f32
    %32 = arith.mulf %cst_12, %1 : f32
    %33 = vector.broadcast %32 : f32 to vector<256x128xf32>
    %34 = arith.mulf %33, %31 : vector<256x128xf32>
    %35 = math.tanh %34 : vector<256x128xf32>
    %cst_13 = arith.constant 1.000000e+00 : f32
    %36 = vector.broadcast %cst_13 : f32 to vector<256x128xf32>
    %37 = arith.subf %36, %35 : vector<256x128xf32>
    %38 = vector.broadcast %0 : f32 to vector<256x128xf32>
    %39 = arith.mulf %37, %38 : vector<256x128xf32>
    %40 = arith.addf %20, %39 : vector<256x128xf32>
    %41 = tpu.iota {dimensions = array<i32: 1>} : vector<256x128xi32>
    %c-1_i32 = arith.constant -1 : i32
    %42 = vector.broadcast %c-1_i32 : i32 to vector<256x128xi32>
    %43 = arith.cmpi sgt, %41, %42 : vector<256x128xi32>
    %44 = vector.broadcast %3 : i32 to vector<256x128xi32>
    %45 = arith.cmpi slt, %41, %44 : vector<256x128xi32>
    %46 = arith.andi %43, %45 : vector<256x128xi1>
    %47 = vector.broadcast %2 : f32 to vector<256x128xf32>
    %48 = arith.mulf %40, %47 : vector<256x128xf32>
    %cst_14 = arith.constant -1.000000e+30 : f32
    %49 = vector.broadcast %cst_14 : f32 to vector<256x128xf32>
    %50 = arith.select %46, %48, %49 : vector<256x128xi1>, vector<256x128xf32>
    %cst_15 = arith.constant dense<0xFF800000> : vector<256xf32>
    %51 = vector.multi_reduction <maximumf>, %50, %cst_15 [1] : vector<256x128xf32> to vector<256xf32>
    %52 = vector.shape_cast %51 : vector<256xf32> to vector<256x1xf32>
    %53 = vector.broadcast %52 : vector<256x1xf32> to vector<256x128xf32>
    %54 = arith.subf %50, %53 : vector<256x128xf32>
    %55 = math.exp %54 : vector<256x128xf32>
    %cst_16 = arith.constant 0.000000e+00 : f32
    %56 = vector.broadcast %cst_16 : f32 to vector<256x128xf32>
    %57 = arith.select %46, %55, %56 : vector<256x128xi1>, vector<256x128xf32>
    %cst_17 = arith.constant dense<0.000000e+00> : vector<256xf32>
    %58 = vector.multi_reduction <add>, %57, %cst_17 [1] : vector<256x128xf32> to vector<256xf32>
    %59 = vector.shape_cast %58 : vector<256xf32> to vector<256x1xf32>
    %cst_18 = arith.constant 1.000000e-30 : f32
    %60 = vector.broadcast %cst_18 : f32 to vector<256x1xf32>
    %61 = arith.maximumf %59, %60 : vector<256x1xf32>
    %62 = tpu.reciprocal %61 {approx = true} : vector<256x1xf32> -> vector<256x1xf32>
    %63 = vector.broadcast %62 : vector<256x1xf32> to vector<256x128xf32>
    %64 = arith.mulf %57, %63 : vector<256x128xf32>
    %cst_19 = arith.constant 0.000000e+00 : f32
    %65 = vector.broadcast %cst_19 : f32 to vector<256x128xf32>
    %66 = arith.select %46, %40, %65 : vector<256x128xi1>, vector<256x128xf32>
    %67 = arith.mulf %66, %64 : vector<256x128xf32>
    %cst_20 = arith.constant dense<0.000000e+00> : vector<256xf32>
    %68 = vector.multi_reduction <add>, %67, %cst_20 [1] : vector<256x128xf32> to vector<256xf32>
    %69 = vector.shape_cast %68 : vector<256xf32> to vector<256x1xf32>
    %70 = tpu.iota {dimensions = array<i32: 1>} : vector<256x8xi32>
    %c0_i32 = arith.constant 0 : i32
    %71 = vector.broadcast %c0_i32 : i32 to vector<256x8xi32>
    %72 = arith.cmpi eq, %70, %71 : vector<256x8xi32>
    %cst_21 = arith.constant 0.000000e+00 : f32
    %73 = vector.shape_cast %69 : vector<256x1xf32> to vector<256x1xf32>
    %74 = vector.broadcast %73 : vector<256x1xf32> to vector<256x8xf32>
    %75 = vector.broadcast %cst_21 : f32 to vector<256x8xf32>
    %76 = arith.select %72, %74, %75 : vector<256x8xi1>, vector<256x8xf32>
    %c0_22 = arith.constant 0 : index
    %c0_23 = arith.constant 0 : index
    %77 = vector.load %arg6[%c0_22, %c0_23] : memref<256x8xf32, #tpu.memory_space<vmem>>, vector<256x8xf32>
    tpu.vector_store %arg6[%c0_22, %c0_23], %76 {strides = array<i32>} : memref<256x8xf32, #tpu.memory_space<vmem>>, vector<256x8xf32>,
    return
  }
  func.func @transform_0(%arg0: i32, %arg1: memref<3xf32, #tpu.memory_space<smem>>, %arg2: memref<1xi32, #tpu.memory_space<smem>>) -> (i32, i32) {
    %c0_i32 = arith.constant 0 : i32
    %c0_i32_0 = arith.constant 0 : i32
    return %arg0, %c0_i32 : i32, i32
  }
  func.func @transform_1(%arg0: i32, %arg1: memref<3xf32, #tpu.memory_space<smem>>, %arg2: memref<1xi32, #tpu.memory_space<smem>>) -> (i32, i32) {
    %c0_i32 = arith.constant 0 : i32
    %c0_i32_0 = arith.constant 0 : i32
    %c0_i32_1 = arith.constant 0 : i32
    return %c0_i32, %c0_i32_0 : i32, i32
  }
  func.func @transform_2(%arg0: i32, %arg1: memref<3xf32, #tpu.memory_space<smem>>, %arg2: memref<1xi32, #tpu.memory_space<smem>>) -> (i32, i32) {
    %c0_i32 = arith.constant 0 : i32
    %c0_i32_0 = arith.constant 0 : i32
    %c0_i32_1 = arith.constant 0 : i32
    return %c0_i32, %c0_i32_0 : i32, i32
  }
  func.func @transform_3(%arg0: i32, %arg1: memref<3xf32, #tpu.memory_space<smem>>, %arg2: memref<1xi32, #tpu.memory_space<smem>>) -> (i32, i32) {
    %c0_i32 = arith.constant 0 : i32
    %c0_i32_0 = arith.constant 0 : i32
    return %arg0, %c0_i32 : i32, i32
  }
}

</mosaic_0001>

<llo_original>
// kernel: tpu_custom_call.1
$region0: #{tpu_custom_call.1}
  #allocation0 [shape = 'u32[]', space=smem, size = 0x4, offset = 0x4, fixed_abs, tag = 'smem constant byte address 0x4 - core index']
  #allocation1 [shape = 'u32[72,128]{1,0:T(1,128)}', space=vmem, size = 0x9000, scoped, tag = 'internal scratch']
  #allocation2 [shape = 's32[1]{0}', space=sflag, size = 0x4, scoped, tag = 'scoped memory for tpu_custom_call.1']
  #allocation3 [shape = 'u8[512]{0}', space=smem, size = 0x200, scoped, tag = 'prefetched SMEM operand 0']
  #allocation4 [shape = 's32[1]{0:T(128)S(6)}', space=smem, size = 0x200, scoped, tag = 'prefetched SMEM operand 1']
  %s0 = inlined_call_operand.vmem [shape: f32[3], index: 0, kind: input, shape index: {}]
  %s1 = inlined_call_operand.<no memory space> [shape: s32[1], index: 1, kind: input, shape index: {}]
  %s2 = inlined_call_operand.hbm [shape: bf16[256,128], index: 2, kind: input, shape index: {}]
  %s3 = inlined_call_operand.hbm [shape: bf16[128,128], index: 3, kind: input, shape index: {}]
  %s4 = inlined_call_operand.vmem [shape: f32[2,128], index: 4, kind: input, shape index: {}]
  %s5 = inlined_call_operand.vmem [shape: f32[256,8], index: 5, kind: output, shape index: {}]
  %s6 = sld [smem:[#allocation0]]
  $region30: #{tpu_custom_call.1} parent=0
    _
  %s8 = ssub.s32 1, %s6
  %s9 = scalar_select 0, %s8, %s6
  %s11 = sshll.u32 %s0, 4
  %s12 = int_to_ptr.vmem [resolvable:$true] %s11
  %14 = dma.vmem_to_smem %s12, 16, [#allocation3], [#allocation2]
  %15 = sst [smem:[#allocation4]] %s1
  %17 = dma.done [#allocation2], 16
  %18 = sfence
  $region1: #{tpu_custom_call.1} parent=0
    #allocation5 [shape = 'u8[65536]{0}', space=vmem, size = 0x10000, scoped, tag = 'input window, operand 2, single buffered']
    #allocation6 [shape = 's32[1]{0}', space=sflag, size = 0x4, scoped, tag = 'scoped memory for tpu_custom_call.1']
    #allocation7 [shape = 'u8[32768]{0}', space=vmem, size = 0x8000, scoped, tag = 'input window, operand 3, single buffered']
    #allocation8 [shape = 's32[1]{0}', space=sflag, size = 0x4, scoped, tag = 'scoped memory for tpu_custom_call.1']
    %19 = vsyncpa [#allocation6], 0
    %20 = vsyncpa [#allocation8], 0
    // Predicated region
    $region2: #{tpu_custom_call.1} parent=1 // pred_check
      _
    $region3: #{tpu_custom_call.1} parent=1 // pred_check_branch
      %22 = sbr.rel (0) target = $region5
    $region4: #{tpu_custom_call.1} parent=1 // pred_region
      %24 = vsyncadd [#allocation6], 0
      %s25 = sshll.u32 %s2, 4
      %s26 = int_to_ptr.hbm [resolvable:$true] %s25
      %s27 = sshll.u32 [#allocation5], 4
      %s28 = int_to_ptr.vmem [resolvable:$true] %s27
      %33 = dma.hbm_to_vmem [thread:$0]  %s26, 2048, %s28, [#allocation6], 64, 64, 4
    $region5: #{tpu_custom_call.1} parent=1 // pred_fallthru
      _
    // Predicated region
    $region6: #{tpu_custom_call.1} parent=1 // pred_check
      _
    $region7: #{tpu_custom_call.1} parent=1 // pred_check_branch
      %35 = sbr.rel (0) target = $region9
    $region8: #{tpu_custom_call.1} parent=1 // pred_region
      %37 = vsyncadd [#allocation8], 0
      %s38 = sshll.u32 %s3, 4
      %s39 = int_to_ptr.hbm [resolvable:$true] %s38
      %s40 = sshll.u32 [#allocation7], 4
      %s41 = int_to_ptr.vmem [resolvable:$true] %s40
      %46 = dma.hbm_to_vmem [thread:$0]  %s39, 1024, %s41, [#allocation8], 64, 64, 4
    $region9: #{tpu_custom_call.1} parent=1 // pred_fallthru
      _
    // Predicated region
    $region10: #{tpu_custom_call.1} parent=1 // pred_check
      _
    $region11: #{tpu_custom_call.1} parent=1 // pred_check_branch
      %48 = sbr.rel (0) target = $region13
    $region12: #{tpu_custom_call.1} parent=1 // pred_region
      _
    $region13: #{tpu_custom_call.1} parent=1 // pred_fallthru
      _
    // Predicated region
    $region14: #{tpu_custom_call.1} parent=1 // pred_check
      _
    $region15: #{tpu_custom_call.1} parent=1 // pred_check_branch
      %50 = sbr.rel (0) target = $region17
    $region16: #{tpu_custom_call.1} parent=1 // pred_region
      %52 = dma.done [#allocation6], 2048
    $region17: #{tpu_custom_call.1} parent=1 // pred_fallthru
      _
    // Predicated region
    $region18: #{tpu_custom_call.1} parent=1 // pred_check
      _
    $region19: #{tpu_custom_call.1} parent=1 // pred_check_branch
      %54 = sbr.rel (0) target = $region21
    $region20: #{tpu_custom_call.1} parent=1 // pred_region
      %56 = dma.done [#allocation8], 1024
    $region21: #{tpu_custom_call.1} parent=1 // pred_fallthru
      _
    %s57 = sld [smem:[#allocation3]]
    %s58 = sld [smem:[#allocation3 + $0x1]]
    %s59 = sld [smem:[#allocation3 + $0x2]]
    %s60 = sld [smem:[#allocation4]]
    %v61 = vld [vmem:[#allocation5] sm:$0xf]
    %v62 = vld [vmem:[#allocation5 + $0x4] sm:$0xf]
    %v63 = vld [vmem:[#allocation5 + $0x8] sm:$0xf]
    %v64 = vld [vmem:[#allocation5 + $0xc] sm:$0xf]
    %v65 = vld [vmem:[#allocation5 + $0x10] sm:$0xf]
    %v66 = vld [vmem:[#allocation5 + $0x14] sm:$0xf]
    %v67 = vld [vmem:[#allocation5 + $0x18] sm:$0xf]
    %v68 = vld [vmem:[#allocation5 + $0x1c] sm:$0xf]
    %v69 = vld [vmem:[#allocation5 + $0x20] sm:$0xf]
    %v70 = vld [vmem:[#allocation5 + $0x24] sm:$0xf]
    %v71 = vld [vmem:[#allocation5 + $0x28] sm:$0xf]
    %v72 = vld [vmem:[#allocation5 + $0x2c] sm:$0xf]
    %v73 = vld [vmem:[#allocation5 + $0x30] sm:$0xf]
    %v74 = vld [vmem:[#allocation5 + $0x34] sm:$0xf]
    %v75 = vld [vmem:[#allocation5 + $0x38] sm:$0xf]
    %v76 = vld [vmem:[#allocation5 + $0x3c] sm:$0xf]
    %v77 = vld [vmem:[#allocation5 + $0x40] sm:$0xf]
    %v78 = vld [vmem:[#allocation5 + $0x44] sm:$0xf]
    %v79 = vld [vmem:[#allocation5 + $0x48] sm:$0xf]
    %v80 = vld [vmem:[#allocation5 + $0x4c] sm:$0xf]
    %v81 = vld [vmem:[#allocation5 + $0x50] sm:$0xf]
    %v82 = vld [vmem:[#allocation5 + $0x54] sm:$0xf]
    %v83 = vld [vmem:[#allocation5 + $0x58] sm:$0xf]
    %v84 = vld [vmem:[#allocation5 + $0x5c] sm:$0xf]
    %v85 = vld [vmem:[#allocation5 + $0x60] sm:$0xf]
    %v86 = vld [vmem:[#allocation5 + $0x64] sm:$0xf]
    %v87 = vld [vmem:[#allocation5 + $0x68] sm:$0xf]
    %v88 = vld [vmem:[#allocation5 + $0x6c] sm:$0xf]
    %v89 = vld [vmem:[#allocation5 + $0x70] sm:$0xf]
    %v90 = vld [vmem:[#allocation5 + $0x74] sm:$0xf]
    %v91 = vld [vmem:[#allocation5 + $0x78] sm:$0xf]
    %v92 = vld [vmem:[#allocation5 + $0x7c] sm:$0xf]
    %v93 = vunpack.c.l.bf16 %v61
    %v94 = vunpack.c.l.bf16 %v62
    %v95 = vunpack.c.l.bf16 %v63
    %v96 = vunpack.c.l.bf16 %v64
    %v97 = vunpack.c.l.bf16 %v65
    %v98 = vunpack.c.l.bf16 %v66
    %v99 = vunpack.c.l.bf16 %v67
    %v100 = vunpack.c.l.bf16 %v68
    %v101 = vunpack.c.l.bf16 %v69
    %v102 = vunpack.c.l.bf16 %v70
    %v103 = vunpack.c.l.bf16 %v71
    %v104 = vunpack.c.l.bf16 %v72
    %v105 = vunpack.c.l.bf16 %v73
    %v106 = vunpack.c.l.bf16 %v74
    %v107 = vunpack.c.l.bf16 %v75
    %v108 = vunpack.c.l.bf16 %v76
    %v109 = vunpack.c.l.bf16 %v77
    %v110 = vunpack.c.l.bf16 %v78
    %v111 = vunpack.c.l.bf16 %v79
    %v112 = vunpack.c.l.bf16 %v80
    %v113 = vunpack.c.l.bf16 %v81
    %v114 = vunpack.c.l.bf16 %v82
    %v115 = vunpack.c.l.bf16 %v83
    %v116 = vunpack.c.l.bf16 %v84
    %v117 = vunpack.c.l.bf16 %v85
    %v118 = vunpack.c.l.bf16 %v86
    %v119 = vunpack.c.l.bf16 %v87
    %v120 = vunpack.c.l.bf16 %v88
    %v121 = vunpack.c.l.bf16 %v89
    %v122 = vunpack.c.l.bf16 %v90
    %v123 = vunpack.c.l.bf16 %v91
    %v124 = vunpack.c.l.bf16 %v92
    %v125 = vld [vmem:[%s4] sm:$0x3]
    %v126 = vmul.f32 %v93, %v93
    %v127 = vmul.f32 %v94, %v94
    %v128 = vmul.f32 %v95, %v95
    %v129 = vmul.f32 %v96, %v96
    %v130 = vmul.f32 %v97, %v97
    %v131 = vmul.f32 %v98, %v98
    %v132 = vmul.f32 %v99, %v99
    %v133 = vmul.f32 %v100, %v100
    %v134 = vmul.f32 %v101, %v101
    %v135 = vmul.f32 %v102, %v102
    %v136 = vmul.f32 %v103, %v103
    %v137 = vmul.f32 %v104, %v104
    %v138 = vmul.f32 %v105, %v105
    %v139 = vmul.f32 %v106, %v106
    %v140 = vmul.f32 %v107, %v107
    %v141 = vmul.f32 %v108, %v108
    %v142 = vmul.f32 %v109, %v109
    %v143 = vmul.f32 %v110, %v110
    %v144 = vmul.f32 %v111, %v111
    %v145 = vmul.f32 %v112, %v112
    %v146 = vmul.f32 %v113, %v113
    %v147 = vmul.f32 %v114, %v114
    %v148 = vmul.f32 %v115, %v115
    %v149 = vmul.f32 %v116, %v116
    %v150 = vmul.f32 %v117, %v117
    %v151 = vmul.f32 %v118, %v118
    %v152 = vmul.f32 %v119, %v119
    %v153 = vmul.f32 %v120, %v120
    %v154 = vmul.f32 %v121, %v121
    %v155 = vmul.f32 %v122, %v122
    %v156 = vmul.f32 %v123, %v123
    %v157 = vmul.f32 %v124, %v124
    %158 = vadd.xlane.f32.xlu0 %v126
    %v159 = vpop.xlane.xlu0 %158
    %160 = vadd.xlane.f32.xlu0 %v127
    %v161 = vpop.xlane.xlu0 %160
    %162 = vadd.xlane.f32.xlu0 %v128
    %v163 = vpop.xlane.xlu0 %162
    %164 = vadd.xlane.f32.xlu0 %v129
    %v165 = vpop.xlane.xlu0 %164
    %166 = vadd.xlane.f32.xlu0 %v130
    %v167 = vpop.xlane.xlu0 %166
    %168 = vadd.xlane.f32.xlu0 %v131
    %v169 = vpop.xlane.xlu0 %168
    %170 = vadd.xlane.f32.xlu0 %v132
    %v171 = vpop.xlane.xlu0 %170
    %172 = vadd.xlane.f32.xlu0 %v133
    %v173 = vpop.xlane.xlu0 %172
    %174 = vadd.xlane.f32.xlu0 %v134
    %v175 = vpop.xlane.xlu0 %174
    %176 = vadd.xlane.f32.xlu0 %v135
    %v177 = vpop.xlane.xlu0 %176
    %178 = vadd.xlane.f32.xlu0 %v136
    %v179 = vpop.xlane.xlu0 %178
    %180 = vadd.xlane.f32.xlu0 %v137
    %v181 = vpop.xlane.xlu0 %180
    %182 = vadd.xlane.f32.xlu0 %v138
    %v183 = vpop.xlane.xlu0 %182
    %184 = vadd.xlane.f32.xlu0 %v139
    %v185 = vpop.xlane.xlu0 %184
    %186 = vadd.xlane.f32.xlu0 %v140
    %v187 = vpop.xlane.xlu0 %186
    %188 = vadd.xlane.f32.xlu0 %v141
    %v189 = vpop.xlane.xlu0 %188
    %190 = vadd.xlane.f32.xlu0 %v142
    %v191 = vpop.xlane.xlu0 %190
    %192 = vadd.xlane.f32.xlu0 %v143
    %v193 = vpop.xlane.xlu0 %192
    %194 = vadd.xlane.f32.xlu0 %v144
    %v195 = vpop.xlane.xlu0 %194
    %196 = vadd.xlane.f32.xlu0 %v145
    %v197 = vpop.xlane.xlu0 %196
    %198 = vadd.xlane.f32.xlu0 %v146
    %v199 = vpop.xlane.xlu0 %198
    %200 = vadd.xlane.f32.xlu0 %v147
    %v201 = vpop.xlane.xlu0 %200
    %202 = vadd.xlane.f32.xlu0 %v148
    %v203 = vpop.xlane.xlu0 %202
    %204 = vadd.xlane.f32.xlu0 %v149
    %v205 = vpop.xlane.xlu0 %204
    %206 = vadd.xlane.f32.xlu0 %v150
    %v207 = vpop.xlane.xlu0 %206
    %208 = vadd.xlane.f32.xlu0 %v151
    %v209 = vpop.xlane.xlu0 %208
    %210 = vadd.xlane.f32.xlu0 %v152
    %v211 = vpop.xlane.xlu0 %210
    %212 = vadd.xlane.f32.xlu0 %v153
    %v213 = vpop.xlane.xlu0 %212
    %214 = vadd.xlane.f32.xlu0 %v154
    %v215 = vpop.xlane.xlu0 %214
    %216 = vadd.xlane.f32.xlu0 %v155
    %v217 = vpop.xlane.xlu0 %216
    %218 = vadd.xlane.f32.xlu0 %v156
    %v219 = vpop.xlane.xlu0 %218
    %220 = vadd.xlane.f32.xlu0 %v157
    %v221 = vpop.xlane.xlu0 %220
    %v222 = vmax.f32 %v159, 1e-24
    %v223 = vmax.f32 %v161, 1e-24
    %v224 = vmax.f32 %v163, 1e-24
    %v225 = vmax.f32 %v165, 1e-24
    %v226 = vmax.f32 %v167, 1e-24
    %v227 = vmax.f32 %v169, 1e-24
    %v228 = vmax.f32 %v171, 1e-24
    %v229 = vmax.f32 %v173, 1e-24
    %v230 = vmax.f32 %v175, 1e-24
    %v231 = vmax.f32 %v177, 1e-24
    %v232 = vmax.f32 %v179, 1e-24
    %v233 = vmax.f32 %v181, 1e-24
    %v234 = vmax.f32 %v183, 1e-24
    %v235 = vmax.f32 %v185, 1e-24
    %v236 = vmax.f32 %v187, 1e-24
    %v237 = vmax.f32 %v189, 1e-24
    %v238 = vmax.f32 %v191, 1e-24
    %v239 = vmax.f32 %v193, 1e-24
    %v240 = vmax.f32 %v195, 1e-24
    %v241 = vmax.f32 %v197, 1e-24
    %v242 = vmax.f32 %v199, 1e-24
    %v243 = vmax.f32 %v201, 1e-24
    %v244 = vmax.f32 %v203, 1e-24
    %v245 = vmax.f32 %v205, 1e-24
    %v246 = vmax.f32 %v207, 1e-24
    %v247 = vmax.f32 %v209, 1e-24
    %v248 = vmax.f32 %v211, 1e-24
    %v249 = vmax.f32 %v213, 1e-24
    %v250 = vmax.f32 %v215, 1e-24
    %v251 = vmax.f32 %v217, 1e-24
    %v252 = vmax.f32 %v219, 1e-24
    %v253 = vmax.f32 %v221, 1e-24
    %v254 = vrsqrt.pop %v222
    %v255 = vmul.f32 %v254, %v222
    %v256 = vmul.f32 %v255, %v254
    %v257 = vmul.f32 0.5, %v256
    %v258 = vsub.f32 1.5, %v257
    %v259 = vmul.f32 %v254, %v258
    %vm260 = vweird.f32 %v222
    %vm261 = vweird.f32 %v254
    %vm262 = vmor %vm260, %vm261
    %v263 = vsel %vm262, %v254, %v259
    %v264 = vrsqrt.pop %v223
    %v265 = vmul.f32 %v264, %v223
    %v266 = vmul.f32 %v265, %v264
    %v267 = vmul.f32 0.5, %v266
    %v268 = vsub.f32 1.5, %v267
    %v269 = vmul.f32 %v264, %v268
    %vm270 = vweird.f32 %v223
    %vm271 = vweird.f32 %v264
    %vm272 = vmor %vm270, %vm271
    %v273 = vsel %vm272, %v264, %v269
    %v274 = vrsqrt.pop %v224
    %v275 = vmul.f32 %v274, %v224
    %v276 = vmul.f32 %v275, %v274
    %v277 = vmul.f32 0.5, %v276
    %v278 = vsub.f32 1.5, %v277
    %v279 = vmul.f32 %v274, %v278
    %vm280 = vweird.f32 %v224
    %vm281 = vweird.f32 %v274
    %vm282 = vmor %vm280, %vm281
    %v283 = vsel %vm282, %v274, %v279
    %v284 = vrsqrt.pop %v225
    %v285 = vmul.f32 %v284, %v225
    %v286 = vmul.f32 %v285, %v284
    %v287 = vmul.f32 0.5, %v286
    %v288 = vsub.f32 1.5, %v287
    %v289 = vmul.f32 %v284, %v288
    %vm290 = vweird.f32 %v225
    %vm291 = vweird.f32 %v284
    %vm292 = vmor %vm290, %vm291
    %v293 = vsel %vm292, %v284, %v289
    %v294 = vrsqrt.pop %v226
    %v295 = vmul.f32 %v294, %v226
    %v296 = vmul.f32 %v295, %v294
    %v297 = vmul.f32 0.5, %v296
    %v298 = vsub.f32 1.5, %v297
    %v299 = vmul.f32 %v294, %v298
    %vm300 = vweird.f32 %v226
    %vm301 = vweird.f32 %v294
    %vm302 = vmor %vm300, %vm301
    %v303 = vsel %vm302, %v294, %v299
    %v304 = vrsqrt.pop %v227
    %v305 = vmul.f32 %v304, %v227
    %v306 = vmul.f32 %v305, %v304
    %v307 = vmul.f32 0.5, %v306
    %v308 = vsub.f32 1.5, %v307
    %v309 = vmul.f32 %v304, %v308
    %vm310 = vweird.f32 %v227
    %vm311 = vweird.f32 %v304
    %vm312 = vmor %vm310, %vm311
    %v313 = vsel %vm312, %v304, %v309
    %v314 = vrsqrt.pop %v228
    %v315 = vmul.f32 %v314, %v228
    %v316 = vmul.f32 %v315, %v314
    %v317 = vmul.f32 0.5, %v316
    %v318 = vsub.f32 1.5, %v317
    %v319 = vmul.f32 %v314, %v318
    %vm320 = vweird.f32 %v228
    %vm321 = vweird.f32 %v314
    %vm322 = vmor %vm320, %vm321
    %v323 = vsel %vm322, %v314, %v319
    %v324 = vrsqrt.pop %v229
    %v325 = vmul.f32 %v324, %v229
    %v326 = vmul.f32 %v325, %v324
    %v327 = vmul.f32 0.5, %v326
    %v328 = vsub.f32 1.5, %v327
    %v329 = vmul.f32 %v324, %v328
    %vm330 = vweird.f32 %v229
    %vm331 = vweird.f32 %v324
    %vm332 = vmor %vm330, %vm331
    %v333 = vsel %vm332, %v324, %v329
    %v334 = vrsqrt.pop %v230
    %v335 = vmul.f32 %v334, %v230
    %v336 = vmul.f32 %v335, %v334
    %v337 = vmul.f32 0.5, %v336
    %v338 = vsub.f32 1.5, %v337
    %v339 = vmul.f32 %v334, %v338
    %vm340 = vweird.f32 %v230
    %vm341 = vweird.f32 %v334
    %vm342 = vmor %vm340, %vm341
    %v343 = vsel %vm342, %v334, %v339
    %v344 = vrsqrt.pop %v231
    %v345 = vmul.f32 %v344, %v231
    %v346 = vmul.f32 %v345, %v344
    %v347 = vmul.f32 0.5, %v346
    %v348 = vsub.f32 1.5, %v347
    %v349 = vmul.f32 %v344, %v348
    %vm350 = vweird.f32 %v231
    %vm351 = vweird.f32 %v344
    %vm352 = vmor %vm350, %vm351
    %v353 = vsel %vm352, %v344, %v349
    %v354 = vrsqrt.pop %v232
    %v355 = vmul.f32 %v354, %v232
    %v356 = vmul.f32 %v355, %v354
    %v357 = vmul.f32 0.5, %v356
    %v358 = vsub.f32 1.5, %v357
    %v359 = vmul.f32 %v354, %v358
    %vm360 = vweird.f32 %v232
    %vm361 = vweird.f32 %v354
    %vm362 = vmor %vm360, %vm361
    %v363 = vsel %vm362, %v354, %v359
    %v364 = vrsqrt.pop %v233
    %v365 = vmul.f32 %v364, %v233
    %v366 = vmul.f32 %v365, %v364
    %v367 = vmul.f32 0.5, %v366
    %v368 = vsub.f32 1.5, %v367
    %v369 = vmul.f32 %v364, %v368
    %vm370 = vweird.f32 %v233
    %vm371 = vweird.f32 %v364
    %vm372 = vmor %vm370, %vm371
    %v373 = vsel %vm372, %v364, %v369
    %v374 = vrsqrt.pop %v234
    %v375 = vmul.f32 %v374, %v234
    %v376 = vmul.f32 %v375, %v374
    %v377 = vmul.f32 0.5, %v376
    %v378 = vsub.f32 1.5, %v377
    %v379 = vmul.f32 %v374, %v378
    %vm380 = vweird.f32 %v234
    %vm381 = vweird.f32 %v374
    %vm382 = vmor %vm380, %vm381
    %v383 = vsel %vm382, %v374, %v379
    %v384 = vrsqrt.pop %v235
    %v385 = vmul.f32 %v384, %v235
    %v386 = vmul.f32 %v385, %v384
    %v387 = vmul.f32 0.5, %v386
    %v388 = vsub.f32 1.5, %v387
    %v389 = vmul.f32 %v384, %v388
    %vm390 = vweird.f32 %v235
    %vm391 = vweird.f32 %v384
    %vm392 = vmor %vm390, %vm391
    %v393 = vsel %vm392, %v384, %v389
    %v394 = vrsqrt.pop %v236
    %v395 = vmul.f32 %v394, %v236
    %v396 = vmul.f32 %v395, %v394
    %v397 = vmul.f32 0.5, %v396
    %v398 = vsub.f32 1.5, %v397
    %v399 = vmul.f32 %v394, %v398
    %vm400 = vweird.f32 %v236
    %vm401 = vweird.f32 %v394
    %vm402 = vmor %vm400, %vm401
    %v403 = vsel %vm402, %v394, %v399
    %v404 = vrsqrt.pop %v237
    %v405 = vmul.f32 %v404, %v237
    %v406 = vmul.f32 %v405, %v404
    %v407 = vmul.f32 0.5, %v406
    %v408 = vsub.f32 1.5, %v407
    %v409 = vmul.f32 %v404, %v408
    %vm410 = vweird.f32 %v237
    %vm411 = vweird.f32 %v404
    %vm412 = vmor %vm410, %vm411
    %v413 = vsel %vm412, %v404, %v409
    %v414 = vrsqrt.pop %v238
    %v415 = vmul.f32 %v414, %v238
    %v416 = vmul.f32 %v415, %v414
    %v417 = vmul.f32 0.5, %v416
    %v418 = vsub.f32 1.5, %v417
    %v419 = vmul.f32 %v414, %v418
    %vm420 = vweird.f32 %v238
    %vm421 = vweird.f32 %v414
    %vm422 = vmor %vm420, %vm421
    %v423 = vsel %vm422, %v414, %v419
    %v424 = vrsqrt.pop %v239
    %v425 = vmul.f32 %v424, %v239
    %v426 = vmul.f32 %v425, %v424
    %v427 = vmul.f32 0.5, %v426
    %v428 = vsub.f32 1.5, %v427
    %v429 = vmul.f32 %v424, %v428
    %vm430 = vweird.f32 %v239
    %vm431 = vweird.f32 %v424
    %vm432 = vmor %vm430, %vm431
    %v433 = vsel %vm432, %v424, %v429
    %v434 = vrsqrt.pop %v240
    %v435 = vmul.f32 %v434, %v240
    %v436 = vmul.f32 %v435, %v434
    %v437 = vmul.f32 0.5, %v436
    %v438 = vsub.f32 1.5, %v437
    %v439 = vmul.f32 %v434, %v438
    %vm440 = vweird.f32 %v240
    %vm441 = vweird.f32 %v434
    %vm442 = vmor %vm440, %vm441
    %v443 = vsel %vm442, %v434, %v439
    %v444 = vrsqrt.pop %v241
    %v445 = vmul.f32 %v444, %v241
    %v446 = vmul.f32 %v445, %v444
    %v447 = vmul.f32 0.5, %v446
    %v448 = vsub.f32 1.5, %v447
    %v449 = vmul.f32 %v444, %v448
    %vm450 = vweird.f32 %v241
    %vm451 = vweird.f32 %v444
    %vm452 = vmor %vm450, %vm451
    %v453 = vsel %vm452, %v444, %v449
    %v454 = vrsqrt.pop %v242
    %v455 = vmul.f32 %v454, %v242
    %v456 = vmul.f32 %v455, %v454
    %v457 = vmul.f32 0.5, %v456
    %v458 = vsub.f32 1.5, %v457
    %v459 = vmul.f32 %v454, %v458
    %vm460 = vweird.f32 %v242
    %vm461 = vweird.f32 %v454
    %vm462 = vmor %vm460, %vm461
    %v463 = vsel %vm462, %v454, %v459
    %v464 = vrsqrt.pop %v243
    %v465 = vmul.f32 %v464, %v243
    %v466 = vmul.f32 %v465, %v464
    %v467 = vmul.f32 0.5, %v466
    %v468 = vsub.f32 1.5, %v467
    %v469 = vmul.f32 %v464, %v468
    %vm470 = vweird.f32 %v243
    %vm471 = vweird.f32 %v464
    %vm472 = vmor %vm470, %vm471
    %v473 = vsel %vm472, %v464, %v469
    %v474 = vrsqrt.pop %v244
    %v475 = vmul.f32 %v474, %v244
    %v476 = vmul.f32 %v475, %v474
    %v477 = vmul.f32 0.5, %v476
    %v478 = vsub.f32 1.5, %v477
    %v479 = vmul.f32 %v474, %v478
    %vm480 = vweird.f32 %v244
    %vm481 = vweird.f32 %v474
    %vm482 = vmor %vm480, %vm481
    %v483 = vsel %vm482, %v474, %v479
    %v484 = vrsqrt.pop %v245
    %v485 = vmul.f32 %v484, %v245
    %v486 = vmul.f32 %v485, %v484
    %v487 = vmul.f32 0.5, %v486
    %v488 = vsub.f32 1.5, %v487
    %v489 = vmul.f32 %v484, %v488
    %vm490 = vweird.f32 %v245
    %vm491 = vweird.f32 %v484
    %vm492 = vmor %vm490, %vm491
    %v493 = vsel %vm492, %v484, %v489
    %v494 = vrsqrt.pop %v246
    %v495 = vmul.f32 %v494, %v246
    %v496 = vmul.f32 %v495, %v494
    %v497 = vmul.f32 0.5, %v496
    %v498 = vsub.f32 1.5, %v497
    %v499 = vmul.f32 %v494, %v498
    %vm500 = vweird.f32 %v246
    %vm501 = vweird.f32 %v494
    %vm502 = vmor %vm500, %vm501
    %v503 = vsel %vm502, %v494, %v499
    %v504 = vrsqrt.pop %v247
    %v505 = vmul.f32 %v504, %v247
    %v506 = vmul.f32 %v505, %v504
    %v507 = vmul.f32 0.5, %v506
    %v508 = vsub.f32 1.5, %v507
    %v509 = vmul.f32 %v504, %v508
    %vm510 = vweird.f32 %v247
    %vm511 = vweird.f32 %v504
    %vm512 = vmor %vm510, %vm511
    %v513 = vsel %vm512, %v504, %v509
    %v514 = vrsqrt.pop %v248
    %v515 = vmul.f32 %v514, %v248
    %v516 = vmul.f32 %v515, %v514
    %v517 = vmul.f32 0.5, %v516
    %v518 = vsub.f32 1.5, %v517
    %v519 = vmul.f32 %v514, %v518
    %vm520 = vweird.f32 %v248
    %vm521 = vweird.f32 %v514
    %vm522 = vmor %vm520, %vm521
    %v523 = vsel %vm522, %v514, %v519
    %v524 = vrsqrt.pop %v249
    %v525 = vmul.f32 %v524, %v249
    %v526 = vmul.f32 %v525, %v524
    %v527 = vmul.f32 0.5, %v526
    %v528 = vsub.f32 1.5, %v527
    %v529 = vmul.f32 %v524, %v528
    %vm530 = vweird.f32 %v249
    %vm531 = vweird.f32 %v524
    %vm532 = vmor %vm530, %vm531
    %v533 = vsel %vm532, %v524, %v529
    %v534 = vrsqrt.pop %v250
    %v535 = vmul.f32 %v534, %v250
    %v536 = vmul.f32 %v535, %v534
    %v537 = vmul.f32 0.5, %v536
    %v538 = vsub.f32 1.5, %v537
    %v539 = vmul.f32 %v534, %v538
    %vm540 = vweird.f32 %v250
    %vm541 = vweird.f32 %v534
    %vm542 = vmor %vm540, %vm541
    %v543 = vsel %vm542, %v534, %v539
    %v544 = vrsqrt.pop %v251
    %v545 = vmul.f32 %v544, %v251
    %v546 = vmul.f32 %v545, %v544
    %v547 = vmul.f32 0.5, %v546
    %v548 = vsub.f32 1.5, %v547
    %v549 = vmul.f32 %v544, %v548
    %vm550 = vweird.f32 %v251
    %vm551 = vweird.f32 %v544
    %vm552 = vmor %vm550, %vm551
    %v553 = vsel %vm552, %v544, %v549
    %v554 = vrsqrt.pop %v252
    %v555 = vmul.f32 %v554, %v252
    %v556 = vmul.f32 %v555, %v554
    %v557 = vmul.f32 0.5, %v556
    %v558 = vsub.f32 1.5, %v557
    %v559 = vmul.f32 %v554, %v558
    %vm560 = vweird.f32 %v252
    %vm561 = vweird.f32 %v554
    %vm562 = vmor %vm560, %vm561
    %v563 = vsel %vm562, %v554, %v559
    %v564 = vrsqrt.pop %v253
    %v565 = vmul.f32 %v564, %v253
    %v566 = vmul.f32 %v565, %v564
    %v567 = vmul.f32 0.5, %v566
    %v568 = vsub.f32 1.5, %v567
    %v569 = vmul.f32 %v564, %v568
    %vm570 = vweird.f32 %v253
    %vm571 = vweird.f32 %v564
    %vm572 = vmor %vm570, %vm571
    %v573 = vsel %vm572, %v564, %v569
    %v574 = vld [vmem:[#allocation7] sm:$0xf]
    %v575 = vld [vmem:[#allocation7 + $0x4] sm:$0xf]
    %v576 = vld [vmem:[#allocation7 + $0x8] sm:$0xf]
    %v577 = vld [vmem:[#allocation7 + $0xc] sm:$0xf]
    %v578 = vld [vmem:[#allocation7 + $0x10] sm:$0xf]
    %v579 = vld [vmem:[#allocation7 + $0x14] sm:$0xf]
    %v580 = vld [vmem:[#allocation7 + $0x18] sm:$0xf]
    %v581 = vld [vmem:[#allocation7 + $0x1c] sm:$0xf]
    %v582 = vld [vmem:[#allocation7 + $0x20] sm:$0xf]
    %v583 = vld [vmem:[#allocation7 + $0x24] sm:$0xf]
    %v584 = vld [vmem:[#allocation7 + $0x28] sm:$0xf]
    %v585 = vld [vmem:[#allocation7 + $0x2c] sm:$0xf]
    %v586 = vld [vmem:[#allocation7 + $0x30] sm:$0xf]
    %v587 = vld [vmem:[#allocation7 + $0x34] sm:$0xf]
    %v588 = vld [vmem:[#allocation7 + $0x38] sm:$0xf]
    %v589 = vld [vmem:[#allocation7 + $0x3c] sm:$0xf]
    %v622 = vunpack.c.l.b16 %v61
    %v623 = vunpack.c.l.b16 %v62
    %v624 = vunpack.c.l.b16 %v63
    %v625 = vunpack.c.l.b16 %v64
    %v626 = vunpack.c.l.b16 %v65
    %v627 = vunpack.c.l.b16 %v66
    %v628 = vunpack.c.l.b16 %v67
    %v629 = vunpack.c.l.b16 %v68
    %v630 = vunpack.c.l.b16 %v69
    %v631 = vunpack.c.l.b16 %v70
    %v632 = vunpack.c.l.b16 %v71
    %v633 = vunpack.c.l.b16 %v72
    %v634 = vunpack.c.l.b16 %v73
    %v635 = vunpack.c.l.b16 %v74
    %v636 = vunpack.c.l.b16 %v75
    %v637 = vunpack.c.l.b16 %v76
    %v638 = vunpack.c.l.b16 %v77
    %v639 = vunpack.c.l.b16 %v78
    %v640 = vunpack.c.l.b16 %v79
    %v641 = vunpack.c.l.b16 %v80
    %v642 = vunpack.c.l.b16 %v81
    %v643 = vunpack.c.l.b16 %v82
    %v644 = vunpack.c.l.b16 %v83
    %v645 = vunpack.c.l.b16 %v84
    %v646 = vunpack.c.l.b16 %v85
    %v647 = vunpack.c.l.b16 %v86
    %v648 = vunpack.c.l.b16 %v87
    %v649 = vunpack.c.l.b16 %v88
    %v650 = vunpack.c.l.b16 %v89
    %v651 = vunpack.c.l.b16 %v90
    %v652 = vunpack.c.l.b16 %v91
    %v653 = vunpack.c.l.b16 %v92
    %v654 = vpack.c.b16 %v623, %v622
    %v655 = vpack.c.b16 %v625, %v624
    %v656 = vpack.c.b16 %v627, %v626
    %v657 = vpack.c.b16 %v629, %v628
    %v658 = vpack.c.b16 %v631, %v630
    %v659 = vpack.c.b16 %v633, %v632
    %v660 = vpack.c.b16 %v635, %v634
    %v661 = vpack.c.b16 %v637, %v636
    %v662 = vpack.c.b16 %v639, %v638
    %v663 = vpack.c.b16 %v641, %v640
    %v664 = vpack.c.b16 %v643, %v642
    %v665 = vpack.c.b16 %v645, %v644
    %v666 = vpack.c.b16 %v647, %v646
    %v667 = vpack.c.b16 %v649, %v648
    %v668 = vpack.c.b16 %v651, %v650
    %v669 = vpack.c.b16 %v653, %v652
    %v702 = vunpack.c.l.b16 %v574
    %v703 = vunpack.c.l.b16 %v575
    %v704 = vunpack.c.l.b16 %v576
    %v705 = vunpack.c.l.b16 %v577
    %v706 = vunpack.c.l.b16 %v578
    %v707 = vunpack.c.l.b16 %v579
    %v708 = vunpack.c.l.b16 %v580
    %v709 = vunpack.c.l.b16 %v581
    %v710 = vunpack.c.l.b16 %v582
    %v711 = vunpack.c.l.b16 %v583
    %v712 = vunpack.c.l.b16 %v584
    %v713 = vunpack.c.l.b16 %v585
    %v714 = vunpack.c.l.b16 %v586
    %v715 = vunpack.c.l.b16 %v587
    %v716 = vunpack.c.l.b16 %v588
    %v717 = vunpack.c.l.b16 %v589
    %v718 = vpack.c.b16 %v703, %v702
    %v719 = vpack.c.b16 %v705, %v704
    %v720 = vpack.c.b16 %v707, %v706
    %v721 = vpack.c.b16 %v709, %v708
    %v722 = vpack.c.b16 %v711, %v710
    %v723 = vpack.c.b16 %v713, %v712
    %v724 = vpack.c.b16 %v715, %v714
    %v725 = vpack.c.b16 %v717, %v716
    %734 = vmatpush.bf16.msra.mxu0 %v725
    %735 = vmatpush.bf16.msra.mxu0 %v724
    %736 = vmatpush.bf16.msra.mxu0 %v723
    %737 = vmatpush.bf16.msra.mxu0 %v722
    %738 = vmatpush.bf16.msra.mxu0 %v721
    %739 = vmatpush.bf16.msra.mxu0 %v720
    %740 = vmatpush.bf16.msra.mxu0 %v719
    %741 = vmatpush.bf16.msra.mxu0 %v718
    %742 = vmatmul.bf16.gmra.mxu0 %v654
    %v743 = vpop.f32.mrf.mxu0
    %v744 = vadd.f32 0.0, %v743
    %v745 = vpop.f32.mrf.mxu0
    %v746 = vadd.f32 0.0, %v745
    %747 = vmatmul.bf16.gmra.mxu0 %v655
    %v748 = vpop.f32.mrf.mxu0
    %v749 = vadd.f32 0.0, %v748
    %v750 = vpop.f32.mrf.mxu0
    %v751 = vadd.f32 0.0, %v750
    %752 = vmatmul.bf16.gmra.mxu0 %v656
    %v753 = vpop.f32.mrf.mxu0
    %v754 = vadd.f32 0.0, %v753
    %v755 = vpop.f32.mrf.mxu0
    %v756 = vadd.f32 0.0, %v755
    %757 = vmatmul.bf16.gmra.mxu0 %v657
    %v758 = vpop.f32.mrf.mxu0
    %v759 = vadd.f32 0.0, %v758
    %v760 = vpop.f32.mrf.mxu0
    %v761 = vadd.f32 0.0, %v760
    %762 = vmatmul.bf16.gmra.mxu0 %v658
    %v763 = vpop.f32.mrf.mxu0
    %v764 = vadd.f32 0.0, %v763
    %v765 = vpop.f32.mrf.mxu0
    %v766 = vadd.f32 0.0, %v765
    %767 = vmatmul.bf16.gmra.mxu0 %v659
    %v768 = vpop.f32.mrf.mxu0
    %v769 = vadd.f32 0.0, %v768
    %v770 = vpop.f32.mrf.mxu0
    %v771 = vadd.f32 0.0, %v770
    %772 = vmatmul.bf16.gmra.mxu0 %v660
    %v773 = vpop.f32.mrf.mxu0
    %v774 = vadd.f32 0.0, %v773
    %v775 = vpop.f32.mrf.mxu0
    %v776 = vadd.f32 0.0, %v775
    %777 = vmatmul.bf16.gmra.mxu0 %v661
    %v778 = vpop.f32.mrf.mxu0
    %v779 = vadd.f32 0.0, %v778
    %v780 = vpop.f32.mrf.mxu0
    %v781 = vadd.f32 0.0, %v780
    %782 = vmatmul.bf16.gmra.mxu0 %v662
    %v783 = vpop.f32.mrf.mxu0
    %v784 = vadd.f32 0.0, %v783
    %v785 = vpop.f32.mrf.mxu0
    %v786 = vadd.f32 0.0, %v785
    %787 = vmatmul.bf16.gmra.mxu0 %v663
    %v788 = vpop.f32.mrf.mxu0
    %v789 = vadd.f32 0.0, %v788
    %v790 = vpop.f32.mrf.mxu0
    %v791 = vadd.f32 0.0, %v790
    %792 = vmatmul.bf16.gmra.mxu0 %v664
    %v793 = vpop.f32.mrf.mxu0
    %v794 = vadd.f32 0.0, %v793
    %v795 = vpop.f32.mrf.mxu0
    %v796 = vadd.f32 0.0, %v795
    %797 = vmatmul.bf16.gmra.mxu0 %v665
    %v798 = vpop.f32.mrf.mxu0
    %v799 = vadd.f32 0.0, %v798
    %v800 = vpop.f32.mrf.mxu0
    %v801 = vadd.f32 0.0, %v800
    %802 = vmatmul.bf16.gmra.mxu0 %v666
    %v803 = vpop.f32.mrf.mxu0
    %v804 = vadd.f32 0.0, %v803
    %v805 = vpop.f32.mrf.mxu0
    %v806 = vadd.f32 0.0, %v805
    %807 = vmatmul.bf16.gmra.mxu0 %v667
    %v808 = vpop.f32.mrf.mxu0
    %v809 = vadd.f32 0.0, %v808
    %v810 = vpop.f32.mrf.mxu0
    %v811 = vadd.f32 0.0, %v810
    %812 = vmatmul.bf16.gmra.mxu0 %v668
    %v813 = vpop.f32.mrf.mxu0
    %v814 = vadd.f32 0.0, %v813
    %v815 = vpop.f32.mrf.mxu0
    %v816 = vadd.f32 0.0, %v815
    %817 = vmatmul.bf16.gmra.mxu0 %v669
    %v818 = vpop.f32.mrf.mxu0
    %v819 = vadd.f32 0.0, %v818
    %v820 = vpop.f32.mrf.mxu0
    %v821 = vadd.f32 0.0, %v820
    %822 = vdwg.mxu0
    %v823 = vmul.f32 %v744, %v263
    %v824 = vmul.f32 %v746, %v273
    %v825 = vmul.f32 %v749, %v283
    %v826 = vmul.f32 %v751, %v293
    %v827 = vmul.f32 %v754, %v303
    %v828 = vmul.f32 %v756, %v313
    %v829 = vmul.f32 %v759, %v323
    %v830 = vmul.f32 %v761, %v333
    %v831 = vmul.f32 %v764, %v343
    %v832 = vmul.f32 %v766, %v353
    %v833 = vmul.f32 %v769, %v363
    %v834 = vmul.f32 %v771, %v373
    %v835 = vmul.f32 %v774, %v383
    %v836 = vmul.f32 %v776, %v393
    %v837 = vmul.f32 %v779, %v403
    %v838 = vmul.f32 %v781, %v413
    %v839 = vmul.f32 %v784, %v423
    %v840 = vmul.f32 %v786, %v433
    %v841 = vmul.f32 %v789, %v443
    %v842 = vmul.f32 %v791, %v453
    %v843 = vmul.f32 %v794, %v463
    %v844 = vmul.f32 %v796, %v473
    %v845 = vmul.f32 %v799, %v483
    %v846 = vmul.f32 %v801, %v493
    %v847 = vmul.f32 %v804, %v503
    %v848 = vmul.f32 %v806, %v513
    %v849 = vmul.f32 %v809, %v523
    %v850 = vmul.f32 %v811, %v533
    %v851 = vmul.f32 %v814, %v543
    %v852 = vmul.f32 %v816, %v553
    %v853 = vmul.f32 %v819, %v563
    %v854 = vmul.f32 %v821, %v573
    %v855 = vperm.slane %v125, 1
    %v856 = vmul.f32 %v823, %v855
    %v857 = vmul.f32 %v824, %v855
    %v858 = vmul.f32 %v825, %v855
    %v859 = vmul.f32 %v826, %v855
    %v860 = vmul.f32 %v827, %v855
    %v861 = vmul.f32 %v828, %v855
    %v862 = vmul.f32 %v829, %v855
    %v863 = vmul.f32 %v830, %v855
    %v864 = vmul.f32 %v831, %v855
    %v865 = vmul.f32 %v832, %v855
    %v866 = vmul.f32 %v833, %v855
    %v867 = vmul.f32 %v834, %v855
    %v868 = vmul.f32 %v835, %v855
    %v869 = vmul.f32 %v836, %v855
    %v870 = vmul.f32 %v837, %v855
    %v871 = vmul.f32 %v838, %v855
    %v872 = vmul.f32 %v839, %v855
    %v873 = vmul.f32 %v840, %v855
    %v874 = vmul.f32 %v841, %v855
    %v875 = vmul.f32 %v842, %v855
    %v876 = vmul.f32 %v843, %v855
    %v877 = vmul.f32 %v844, %v855
    %v878 = vmul.f32 %v845, %v855
    %v879 = vmul.f32 %v846, %v855
    %v880 = vmul.f32 %v847, %v855
    %v881 = vmul.f32 %v848, %v855
    %v882 = vmul.f32 %v849, %v855
    %v883 = vmul.f32 %v850, %v855
    %v884 = vmul.f32 %v851, %v855
    %v885 = vmul.f32 %v852, %v855
    %v886 = vmul.f32 %v853, %v855
    %v887 = vmul.f32 %v854, %v855
    %v888 = vperm.slane %v125, 0
    %v889 = vadd.f32 %v159, %v888
    %v890 = vadd.f32 %v161, %v888
    %v891 = vadd.f32 %v163, %v888
    %v892 = vadd.f32 %v165, %v888
    %v893 = vadd.f32 %v167, %v888
    %v894 = vadd.f32 %v169, %v888
    %v895 = vadd.f32 %v171, %v888
    %v896 = vadd.f32 %v173, %v888
    %v897 = vadd.f32 %v175, %v888
    %v898 = vadd.f32 %v177, %v888
    %v899 = vadd.f32 %v179, %v888
    %v900 = vadd.f32 %v181, %v888
    %v901 = vadd.f32 %v183, %v888
    %v902 = vadd.f32 %v185, %v888
    %v903 = vadd.f32 %v187, %v888
    %v904 = vadd.f32 %v189, %v888
    %v905 = vadd.f32 %v191, %v888
    %v906 = vadd.f32 %v193, %v888
    %v907 = vadd.f32 %v195, %v888
    %v908 = vadd.f32 %v197, %v888
    %v909 = vadd.f32 %v199, %v888
    %v910 = vadd.f32 %v201, %v888
    %v911 = vadd.f32 %v203, %v888
    %v912 = vadd.f32 %v205, %v888
    %v913 = vadd.f32 %v207, %v888
    %v914 = vadd.f32 %v209, %v888
    %v915 = vadd.f32 %v211, %v888
    %v916 = vadd.f32 %v213, %v888
    %v917 = vadd.f32 %v215, %v888
    %v918 = vadd.f32 %v217, %v888
    %v919 = vadd.f32 %v219, %v888
    %v920 = vadd.f32 %v221, %v888
    %v921 = vmul.f32 %v744, 2.0
    %v922 = vmul.f32 %v746, 2.0
    %v923 = vmul.f32 %v749, 2.0
    %v924 = vmul.f32 %v751, 2.0
    %v925 = vmul.f32 %v754, 2.0
    %v926 = vmul.f32 %v756, 2.0
    %v927 = vmul.f32 %v759, 2.0
    %v928 = vmul.f32 %v761, 2.0
    %v929 = vmul.f32 %v764, 2.0
    %v930 = vmul.f32 %v766, 2.0
    %v931 = vmul.f32 %v769, 2.0
    %v932 = vmul.f32 %v771, 2.0
    %v933 = vmul.f32 %v774, 2.0
    %v934 = vmul.f32 %v776, 2.0
    %v935 = vmul.f32 %v779, 2.0
    %v936 = vmul.f32 %v781, 2.0
    %v937 = vmul.f32 %v784, 2.0
    %v938 = vmul.f32 %v786, 2.0
    %v939 = vmul.f32 %v789, 2.0
    %v940 = vmul.f32 %v791, 2.0
    %v941 = vmul.f32 %v794, 2.0
    %v942 = vmul.f32 %v796, 2.0
    %v943 = vmul.f32 %v799, 2.0
    %v944 = vmul.f32 %v801, 2.0
    %v945 = vmul.f32 %v804, 2.0
    %v946 = vmul.f32 %v806, 2.0
    %v947 = vmul.f32 %v809, 2.0
    %v948 = vmul.f32 %v811, 2.0
    %v949 = vmul.f32 %v814, 2.0
    %v950 = vmul.f32 %v816, 2.0
    %v951 = vmul.f32 %v819, 2.0
    %v952 = vmul.f32 %v821, 2.0
    %v953 = vsub.f32 %v889, %v921
    %v954 = vsub.f32 %v890, %v922
    %v955 = vsub.f32 %v891, %v923
    %v956 = vsub.f32 %v892, %v924
    %v957 = vsub.f32 %v893, %v925
    %v958 = vsub.f32 %v894, %v926
    %v959 = vsub.f32 %v895, %v927
    %v960 = vsub.f32 %v896, %v928
    %v961 = vsub.f32 %v897, %v929
    %v962 = vsub.f32 %v898, %v930
    %v963 = vsub.f32 %v899, %v931
    %v964 = vsub.f32 %v900, %v932
    %v965 = vsub.f32 %v901, %v933
    %v966 = vsub.f32 %v902, %v934
    %v967 = vsub.f32 %v903, %v935
    %v968 = vsub.f32 %v904, %v936
    %v969 = vsub.f32 %v905, %v937
    %v970 = vsub.f32 %v906, %v938
    %v971 = vsub.f32 %v907, %v939
    %v972 = vsub.f32 %v908, %v940
    %v973 = vsub.f32 %v909, %v941
    %v974 = vsub.f32 %v910, %v942
    %v975 = vsub.f32 %v911, %v943
    %v976 = vsub.f32 %v912, %v944
    %v977 = vsub.f32 %v913, %v945
    %v978 = vsub.f32 %v914, %v946
    %v979 = vsub.f32 %v915, %v947
    %v980 = vsub.f32 %v916, %v948
    %v981 = vsub.f32 %v917, %v949
    %v982 = vsub.f32 %v918, %v950
    %v983 = vsub.f32 %v919, %v951
    %v984 = vsub.f32 %v920, %v952
    %v985 = vmax.f32 %v953, 0.0
    %v986 = vmax.f32 %v954, 0.0
    %v987 = vmax.f32 %v955, 0.0
    %v988 = vmax.f32 %v956, 0.0
    %v989 = vmax.f32 %v957, 0.0
    %v990 = vmax.f32 %v958, 0.0
    %v991 = vmax.f32 %v959, 0.0
    %v992 = vmax.f32 %v960, 0.0
    %v993 = vmax.f32 %v961, 0.0
    %v994 = vmax.f32 %v962, 0.0
    %v995 = vmax.f32 %v963, 0.0
    %v996 = vmax.f32 %v964, 0.0
    %v997 = vmax.f32 %v965, 0.0
    %v998 = vmax.f32 %v966, 0.0
    %v999 = vmax.f32 %v967, 0.0
    %v1000 = vmax.f32 %v968, 0.0
    %v1001 = vmax.f32 %v969, 0.0
    %v1002 = vmax.f32 %v970, 0.0
    %v1003 = vmax.f32 %v971, 0.0
    %v1004 = vmax.f32 %v972, 0.0
    %v1005 = vmax.f32 %v973, 0.0
    %v1006 = vmax.f32 %v974, 0.0
    %v1007 = vmax.f32 %v975, 0.0
    %v1008 = vmax.f32 %v976, 0.0
    %v1009 = vmax.f32 %v977, 0.0
    %v1010 = vmax.f32 %v978, 0.0
    %v1011 = vmax.f32 %v979, 0.0
    %v1012 = vmax.f32 %v980, 0.0
    %v1013 = vmax.f32 %v981, 0.0
    %v1014 = vmax.f32 %v982, 0.0
    %v1015 = vmax.f32 %v983, 0.0
    %v1016 = vmax.f32 %v984, 0.0
    %v1017 = vmul.f32 %v985, 0.0078125
    %v1018 = vmul.f32 %v986, 0.0078125
    %v1019 = vmul.f32 %v987, 0.0078125
    %v1020 = vmul.f32 %v988, 0.0078125
    %v1021 = vmul.f32 %v989, 0.0078125
    %v1022 = vmul.f32 %v990, 0.0078125
    %v1023 = vmul.f32 %v991, 0.0078125
    %v1024 = vmul.f32 %v992, 0.0078125
    %v1025 = vmul.f32 %v993, 0.0078125
    %v1026 = vmul.f32 %v994, 0.0078125
    %v1027 = vmul.f32 %v995, 0.0078125
    %v1028 = vmul.f32 %v996, 0.0078125
    %v1029 = vmul.f32 %v997, 0.0078125
    %v1030 = vmul.f32 %v998, 0.0078125
    %v1031 = vmul.f32 %v999, 0.0078125
    %v1032 = vmul.f32 %v1000, 0.0078125
    %v1033 = vmul.f32 %v1001, 0.0078125
    %v1034 = vmul.f32 %v1002, 0.0078125
    %v1035 = vmul.f32 %v1003, 0.0078125
    %v1036 = vmul.f32 %v1004, 0.0078125
    %v1037 = vmul.f32 %v1005, 0.0078125
    %v1038 = vmul.f32 %v1006, 0.0078125
    %v1039 = vmul.f32 %v1007, 0.0078125
    %v1040 = vmul.f32 %v1008, 0.0078125
    %v1041 = vmul.f32 %v1009, 0.0078125
    %v1042 = vmul.f32 %v1010, 0.0078125
    %v1043 = vmul.f32 %v1011, 0.0078125
    %v1044 = vmul.f32 %v1012, 0.0078125
    %v1045 = vmul.f32 %v1013, 0.0078125
    %v1046 = vmul.f32 %v1014, 0.0078125
    %v1047 = vmul.f32 %v1015, 0.0078125
    %v1048 = vmul.f32 %v1016, 0.0078125
    %v1049 = vrsqrt.pop %v1017
    %v1050 = vmul.f32 %v1049, %v1017
    %v1051 = vmul.f32 %v1050, %v1049
    %v1052 = vmul.f32 0.5, %v1051
    %v1053 = vsub.f32 1.5, %v1052
    %v1054 = vmul.f32 %v1049, %v1053
    %v1055 = vmul.f32 %v1017, %v1054
    %vm1056 = vcmp.eq.f32.partialorder %v1017, inf
    %v1057 = vsel %vm1056, %v1017, %v1055
    %vm1058 = vcmp.eq.f32.partialorder %v1017, 0.0
    %v1059 = vand.u32 %v1017, 2147483648
    %v1060 = vsel %vm1058, %v1059, %v1057
    %v1061 = vrsqrt.pop %v1018
    %v1062 = vmul.f32 %v1061, %v1018
    %v1063 = vmul.f32 %v1062, %v1061
    %v1064 = vmul.f32 0.5, %v1063
    %v1065 = vsub.f32 1.5, %v1064
    %v1066 = vmul.f32 %v1061, %v1065
    %v1067 = vmul.f32 %v1018, %v1066
    %vm1068 = vcmp.eq.f32.partialorder %v1018, inf
    %v1069 = vsel %vm1068, %v1018, %v1067
    %vm1070 = vcmp.eq.f32.partialorder %v1018, 0.0
    %v1071 = vand.u32 %v1018, 2147483648
    %v1072 = vsel %vm1070, %v1071, %v1069
    %v1073 = vrsqrt.pop %v1019
    %v1074 = vmul.f32 %v1073, %v1019
    %v1075 = vmul.f32 %v1074, %v1073
    %v1076 = vmul.f32 0.5, %v1075
    %v1077 = vsub.f32 1.5, %v1076
    %v1078 = vmul.f32 %v1073, %v1077
    %v1079 = vmul.f32 %v1019, %v1078
    %vm1080 = vcmp.eq.f32.partialorder %v1019, inf
    %v1081 = vsel %vm1080, %v1019, %v1079
    %vm1082 = vcmp.eq.f32.partialorder %v1019, 0.0
    %v1083 = vand.u32 %v1019, 2147483648
    %v1084 = vsel %vm1082, %v1083, %v1081
    %v1085 = vrsqrt.pop %v1020
    %v1086 = vmul.f32 %v1085, %v1020
    %v1087 = vmul.f32 %v1086, %v1085
    %v1088 = vmul.f32 0.5, %v1087
    %v1089 = vsub.f32 1.5, %v1088
    %v1090 = vmul.f32 %v1085, %v1089
    %v1091 = vmul.f32 %v1020, %v1090
    %vm1092 = vcmp.eq.f32.partialorder %v1020, inf
    %v1093 = vsel %vm1092, %v1020, %v1091
    %vm1094 = vcmp.eq.f32.partialorder %v1020, 0.0
    %v1095 = vand.u32 %v1020, 2147483648
    %v1096 = vsel %vm1094, %v1095, %v1093
    %v1097 = vrsqrt.pop %v1021
    %v1098 = vmul.f32 %v1097, %v1021
    %v1099 = vmul.f32 %v1098, %v1097
    %v1100 = vmul.f32 0.5, %v1099
    %v1101 = vsub.f32 1.5, %v1100
    %v1102 = vmul.f32 %v1097, %v1101
    %v1103 = vmul.f32 %v1021, %v1102
    %vm1104 = vcmp.eq.f32.partialorder %v1021, inf
    %v1105 = vsel %vm1104, %v1021, %v1103
    %vm1106 = vcmp.eq.f32.partialorder %v1021, 0.0
    %v1107 = vand.u32 %v1021, 2147483648
    %v1108 = vsel %vm1106, %v1107, %v1105
    %v1109 = vrsqrt.pop %v1022
    %v1110 = vmul.f32 %v1109, %v1022
    %v1111 = vmul.f32 %v1110, %v1109
    %v1112 = vmul.f32 0.5, %v1111
    %v1113 = vsub.f32 1.5, %v1112
    %v1114 = vmul.f32 %v1109, %v1113
    %v1115 = vmul.f32 %v1022, %v1114
    %vm1116 = vcmp.eq.f32.partialorder %v1022, inf
    %v1117 = vsel %vm1116, %v1022, %v1115
    %vm1118 = vcmp.eq.f32.partialorder %v1022, 0.0
    %v1119 = vand.u32 %v1022, 2147483648
    %v1120 = vsel %vm1118, %v1119, %v1117
    %v1121 = vrsqrt.pop %v1023
    %v1122 = vmul.f32 %v1121, %v1023
    %v1123 = vmul.f32 %v1122, %v1121
    %v1124 = vmul.f32 0.5, %v1123
    %v1125 = vsub.f32 1.5, %v1124
    %v1126 = vmul.f32 %v1121, %v1125
    %v1127 = vmul.f32 %v1023, %v1126
    %vm1128 = vcmp.eq.f32.partialorder %v1023, inf
    %v1129 = vsel %vm1128, %v1023, %v1127
    %vm1130 = vcmp.eq.f32.partialorder %v1023, 0.0
    %v1131 = vand.u32 %v1023, 2147483648
    %v1132 = vsel %vm1130, %v1131, %v1129
    %v1133 = vrsqrt.pop %v1024
    %v1134 = vmul.f32 %v1133, %v1024
    %v1135 = vmul.f32 %v1134, %v1133
    %v1136 = vmul.f32 0.5, %v1135
    %v1137 = vsub.f32 1.5, %v1136
    %v1138 = vmul.f32 %v1133, %v1137
    %v1139 = vmul.f32 %v1024, %v1138
    %vm1140 = vcmp.eq.f32.partialorder %v1024, inf
    %v1141 = vsel %vm1140, %v1024, %v1139
    %vm1142 = vcmp.eq.f32.partialorder %v1024, 0.0
    %v1143 = vand.u32 %v1024, 2147483648
    %v1144 = vsel %vm1142, %v1143, %v1141
    %v1145 = vrsqrt.pop %v1025
    %v1146 = vmul.f32 %v1145, %v1025
    %v1147 = vmul.f32 %v1146, %v1145
    %v1148 = vmul.f32 0.5, %v1147
    %v1149 = vsub.f32 1.5, %v1148
    %v1150 = vmul.f32 %v1145, %v1149
    %v1151 = vmul.f32 %v1025, %v1150
    %vm1152 = vcmp.eq.f32.partialorder %v1025, inf
    %v1153 = vsel %vm1152, %v1025, %v1151
    %vm1154 = vcmp.eq.f32.partialorder %v1025, 0.0
    %v1155 = vand.u32 %v1025, 2147483648
    %v1156 = vsel %vm1154, %v1155, %v1153
    %v1157 = vrsqrt.pop %v1026
    %v1158 = vmul.f32 %v1157, %v1026
    %v1159 = vmul.f32 %v1158, %v1157
    %v1160 = vmul.f32 0.5, %v1159
    %v1161 = vsub.f32 1.5, %v1160
    %v1162 = vmul.f32 %v1157, %v1161
    %v1163 = vmul.f32 %v1026, %v1162
    %vm1164 = vcmp.eq.f32.partialorder %v1026, inf
    %v1165 = vsel %vm1164, %v1026, %v1163
    %vm1166 = vcmp.eq.f32.partialorder %v1026, 0.0
    %v1167 = vand.u32 %v1026, 2147483648
    %v1168 = vsel %vm1166, %v1167, %v1165
    %v1169 = vrsqrt.pop %v1027
    %v1170 = vmul.f32 %v1169, %v1027
    %v1171 = vmul.f32 %v1170, %v1169
    %v1172 = vmul.f32 0.5, %v1171
    %v1173 = vsub.f32 1.5, %v1172
    %v1174 = vmul.f32 %v1169, %v1173
    %v1175 = vmul.f32 %v1027, %v1174
    %vm1176 = vcmp.eq.f32.partialorder %v1027, inf
    %v1177 = vsel %vm1176, %v1027, %v1175
    %vm1178 = vcmp.eq.f32.partialorder %v1027, 0.0
    %v1179 = vand.u32 %v1027, 2147483648
    %v1180 = vsel %vm1178, %v1179, %v1177
    %v1181 = vrsqrt.pop %v1028
    %v1182 = vmul.f32 %v1181, %v1028
    %v1183 = vmul.f32 %v1182, %v1181
    %v1184 = vmul.f32 0.5, %v1183
    %v1185 = vsub.f32 1.5, %v1184
    %v1186 = vmul.f32 %v1181, %v1185
    %v1187 = vmul.f32 %v1028, %v1186
    %vm1188 = vcmp.eq.f32.partialorder %v1028, inf
    %v1189 = vsel %vm1188, %v1028, %v1187
    %vm1190 = vcmp.eq.f32.partialorder %v1028, 0.0
    %v1191 = vand.u32 %v1028, 2147483648
    %v1192 = vsel %vm1190, %v1191, %v1189
    %v1193 = vrsqrt.pop %v1029
    %v1194 = vmul.f32 %v1193, %v1029
    %v1195 = vmul.f32 %v1194, %v1193
    %v1196 = vmul.f32 0.5, %v1195
    %v1197 = vsub.f32 1.5, %v1196
    %v1198 = vmul.f32 %v1193, %v1197
    %v1199 = vmul.f32 %v1029, %v1198
    %vm1200 = vcmp.eq.f32.partialorder %v1029, inf
    %v1201 = vsel %vm1200, %v1029, %v1199
    %vm1202 = vcmp.eq.f32.partialorder %v1029, 0.0
    %v1203 = vand.u32 %v1029, 2147483648
    %v1204 = vsel %vm1202, %v1203, %v1201
    %v1205 = vrsqrt.pop %v1030
    %v1206 = vmul.f32 %v1205, %v1030
    %v1207 = vmul.f32 %v1206, %v1205
    %v1208 = vmul.f32 0.5, %v1207
    %v1209 = vsub.f32 1.5, %v1208
    %v1210 = vmul.f32 %v1205, %v1209
    %v1211 = vmul.f32 %v1030, %v1210
    %vm1212 = vcmp.eq.f32.partialorder %v1030, inf
    %v1213 = vsel %vm1212, %v1030, %v1211
    %vm1214 = vcmp.eq.f32.partialorder %v1030, 0.0
    %v1215 = vand.u32 %v1030, 2147483648
    %v1216 = vsel %vm1214, %v1215, %v1213
    %v1217 = vrsqrt.pop %v1031
    %v1218 = vmul.f32 %v1217, %v1031
    %v1219 = vmul.f32 %v1218, %v1217
    %v1220 = vmul.f32 0.5, %v1219
    %v1221 = vsub.f32 1.5, %v1220
    %v1222 = vmul.f32 %v1217, %v1221
    %v1223 = vmul.f32 %v1031, %v1222
    %vm1224 = vcmp.eq.f32.partialorder %v1031, inf
    %v1225 = vsel %vm1224, %v1031, %v1223
    %vm1226 = vcmp.eq.f32.partialorder %v1031, 0.0
    %v1227 = vand.u32 %v1031, 2147483648
    %v1228 = vsel %vm1226, %v1227, %v1225
    %v1229 = vrsqrt.pop %v1032
    %v1230 = vmul.f32 %v1229, %v1032
    %v1231 = vmul.f32 %v1230, %v1229
    %v1232 = vmul.f32 0.5, %v1231
    %v1233 = vsub.f32 1.5, %v1232
    %v1234 = vmul.f32 %v1229, %v1233
    %v1235 = vmul.f32 %v1032, %v1234
    %vm1236 = vcmp.eq.f32.partialorder %v1032, inf
    %v1237 = vsel %vm1236, %v1032, %v1235
    %vm1238 = vcmp.eq.f32.partialorder %v1032, 0.0
    %v1239 = vand.u32 %v1032, 2147483648
    %v1240 = vsel %vm1238, %v1239, %v1237
    %v1241 = vrsqrt.pop %v1033
    %v1242 = vmul.f32 %v1241, %v1033
    %v1243 = vmul.f32 %v1242, %v1241
    %v1244 = vmul.f32 0.5, %v1243
    %v1245 = vsub.f32 1.5, %v1244
    %v1246 = vmul.f32 %v1241, %v1245
    %v1247 = vmul.f32 %v1033, %v1246
    %vm1248 = vcmp.eq.f32.partialorder %v1033, inf
    %v1249 = vsel %vm1248, %v1033, %v1247
    %vm1250 = vcmp.eq.f32.partialorder %v1033, 0.0
    %v1251 = vand.u32 %v1033, 2147483648
    %v1252 = vsel %vm1250, %v1251, %v1249
    %v1253 = vrsqrt.pop %v1034
    %v1254 = vmul.f32 %v1253, %v1034
    %v1255 = vmul.f32 %v1254, %v1253
    %v1256 = vmul.f32 0.5, %v1255
    %v1257 = vsub.f32 1.5, %v1256
    %v1258 = vmul.f32 %v1253, %v1257
    %v1259 = vmul.f32 %v1034, %v1258
    %vm1260 = vcmp.eq.f32.partialorder %v1034, inf
    %v1261 = vsel %vm1260, %v1034, %v1259
    %vm1262 = vcmp.eq.f32.partialorder %v1034, 0.0
    %v1263 = vand.u32 %v1034, 2147483648
    %v1264 = vsel %vm1262, %v1263, %v1261
    %v1265 = vrsqrt.pop %v1035
    %v1266 = vmul.f32 %v1265, %v1035
    %v1267 = vmul.f32 %v1266, %v1265
    %v1268 = vmul.f32 0.5, %v1267
    %v1269 = vsub.f32 1.5, %v1268
    %v1270 = vmul.f32 %v1265, %v1269
    %v1271 = vmul.f32 %v1035, %v1270
    %vm1272 = vcmp.eq.f32.partialorder %v1035, inf
    %v1273 = vsel %vm1272, %v1035, %v1271
    %vm1274 = vcmp.eq.f32.partialorder %v1035, 0.0
    %v1275 = vand.u32 %v1035, 2147483648
    %v1276 = vsel %vm1274, %v1275, %v1273
    %v1277 = vrsqrt.pop %v1036
    %v1278 = vmul.f32 %v1277, %v1036
    %v1279 = vmul.f32 %v1278, %v1277
    %v1280 = vmul.f32 0.5, %v1279
    %v1281 = vsub.f32 1.5, %v1280
    %v1282 = vmul.f32 %v1277, %v1281
    %v1283 = vmul.f32 %v1036, %v1282
    %vm1284 = vcmp.eq.f32.partialorder %v1036, inf
    %v1285 = vsel %vm1284, %v1036, %v1283
    %vm1286 = vcmp.eq.f32.partialorder %v1036, 0.0
    %v1287 = vand.u32 %v1036, 2147483648
    %v1288 = vsel %vm1286, %v1287, %v1285
    %v1289 = vrsqrt.pop %v1037
    %v1290 = vmul.f32 %v1289, %v1037
    %v1291 = vmul.f32 %v1290, %v1289
    %v1292 = vmul.f32 0.5, %v1291
    %v1293 = vsub.f32 1.5, %v1292
    %v1294 = vmul.f32 %v1289, %v1293
    %v1295 = vmul.f32 %v1037, %v1294
    %vm1296 = vcmp.eq.f32.partialorder %v1037, inf
    %v1297 = vsel %vm1296, %v1037, %v1295
    %vm1298 = vcmp.eq.f32.partialorder %v1037, 0.0
    %v1299 = vand.u32 %v1037, 2147483648
    %v1300 = vsel %vm1298, %v1299, %v1297
    %v1301 = vrsqrt.pop %v1038
    %v1302 = vmul.f32 %v1301, %v1038
    %v1303 = vmul.f32 %v1302, %v1301
    %v1304 = vmul.f32 0.5, %v1303
    %v1305 = vsub.f32 1.5, %v1304
    %v1306 = vmul.f32 %v1301, %v1305
    %v1307 = vmul.f32 %v1038, %v1306
    %vm1308 = vcmp.eq.f32.partialorder %v1038, inf
    %v1309 = vsel %vm1308, %v1038, %v1307
    %vm1310 = vcmp.eq.f32.partialorder %v1038, 0.0
    %v1311 = vand.u32 %v1038, 2147483648
    %v1312 = vsel %vm1310, %v1311, %v1309
    %v1313 = vrsqrt.pop %v1039
    %v1314 = vmul.f32 %v1313, %v1039
    %v1315 = vmul.f32 %v1314, %v1313
    %v1316 = vmul.f32 0.5, %v1315
    %v1317 = vsub.f32 1.5, %v1316
    %v1318 = vmul.f32 %v1313, %v1317
    %v1319 = vmul.f32 %v1039, %v1318
    %vm1320 = vcmp.eq.f32.partialorder %v1039, inf
    %v1321 = vsel %vm1320, %v1039, %v1319
    %vm1322 = vcmp.eq.f32.partialorder %v1039, 0.0
    %v1323 = vand.u32 %v1039, 2147483648
    %v1324 = vsel %vm1322, %v1323, %v1321
    %v1325 = vrsqrt.pop %v1040
    %v1326 = vmul.f32 %v1325, %v1040
    %v1327 = vmul.f32 %v1326, %v1325
    %v1328 = vmul.f32 0.5, %v1327
    %v1329 = vsub.f32 1.5, %v1328
    %v1330 = vmul.f32 %v1325, %v1329
    %v1331 = vmul.f32 %v1040, %v1330
    %vm1332 = vcmp.eq.f32.partialorder %v1040, inf
    %v1333 = vsel %vm1332, %v1040, %v1331
    %vm1334 = vcmp.eq.f32.partialorder %v1040, 0.0
    %v1335 = vand.u32 %v1040, 2147483648
    %v1336 = vsel %vm1334, %v1335, %v1333
    %v1337 = vrsqrt.pop %v1041
    %v1338 = vmul.f32 %v1337, %v1041
    %v1339 = vmul.f32 %v1338, %v1337
    %v1340 = vmul.f32 0.5, %v1339
    %v1341 = vsub.f32 1.5, %v1340
    %v1342 = vmul.f32 %v1337, %v1341
    %v1343 = vmul.f32 %v1041, %v1342
    %vm1344 = vcmp.eq.f32.partialorder %v1041, inf
    %v1345 = vsel %vm1344, %v1041, %v1343
    %vm1346 = vcmp.eq.f32.partialorder %v1041, 0.0
    %v1347 = vand.u32 %v1041, 2147483648
    %v1348 = vsel %vm1346, %v1347, %v1345
    %v1349 = vrsqrt.pop %v1042
    %v1350 = vmul.f32 %v1349, %v1042
    %v1351 = vmul.f32 %v1350, %v1349
    %v1352 = vmul.f32 0.5, %v1351
    %v1353 = vsub.f32 1.5, %v1352
    %v1354 = vmul.f32 %v1349, %v1353
    %v1355 = vmul.f32 %v1042, %v1354
    %vm1356 = vcmp.eq.f32.partialorder %v1042, inf
    %v1357 = vsel %vm1356, %v1042, %v1355
    %vm1358 = vcmp.eq.f32.partialorder %v1042, 0.0
    %v1359 = vand.u32 %v1042, 2147483648
    %v1360 = vsel %vm1358, %v1359, %v1357
    %v1361 = vrsqrt.pop %v1043
    %v1362 = vmul.f32 %v1361, %v1043
    %v1363 = vmul.f32 %v1362, %v1361
    %v1364 = vmul.f32 0.5, %v1363
    %v1365 = vsub.f32 1.5, %v1364
    %v1366 = vmul.f32 %v1361, %v1365
    %v1367 = vmul.f32 %v1043, %v1366
    %vm1368 = vcmp.eq.f32.partialorder %v1043, inf
    %v1369 = vsel %vm1368, %v1043, %v1367
    %vm1370 = vcmp.eq.f32.partialorder %v1043, 0.0
    %v1371 = vand.u32 %v1043, 2147483648
    %v1372 = vsel %vm1370, %v1371, %v1369
    %v1373 = vrsqrt.pop %v1044
    %v1374 = vmul.f32 %v1373, %v1044
    %v1375 = vmul.f32 %v1374, %v1373
    %v1376 = vmul.f32 0.5, %v1375
    %v1377 = vsub.f32 1.5, %v1376
    %v1378 = vmul.f32 %v1373, %v1377
    %v1379 = vmul.f32 %v1044, %v1378
    %vm1380 = vcmp.eq.f32.partialorder %v1044, inf
    %v1381 = vsel %vm1380, %v1044, %v1379
    %vm1382 = vcmp.eq.f32.partialorder %v1044, 0.0
    %v1383 = vand.u32 %v1044, 2147483648
    %v1384 = vsel %vm1382, %v1383, %v1381
    %v1385 = vrsqrt.pop %v1045
    %v1386 = vmul.f32 %v1385, %v1045
    %v1387 = vmul.f32 %v1386, %v1385
    %v1388 = vmul.f32 0.5, %v1387
    %v1389 = vsub.f32 1.5, %v1388
    %v1390 = vmul.f32 %v1385, %v1389
    %v1391 = vmul.f32 %v1045, %v1390
    %vm1392 = vcmp.eq.f32.partialorder %v1045, inf
    %v1393 = vsel %vm1392, %v1045, %v1391
    %vm1394 = vcmp.eq.f32.partialorder %v1045, 0.0
    %v1395 = vand.u32 %v1045, 2147483648
    %v1396 = vsel %vm1394, %v1395, %v1393
    %v1397 = vrsqrt.pop %v1046
    %v1398 = vmul.f32 %v1397, %v1046
    %v1399 = vmul.f32 %v1398, %v1397
    %v1400 = vmul.f32 0.5, %v1399
    %v1401 = vsub.f32 1.5, %v1400
    %v1402 = vmul.f32 %v1397, %v1401
    %v1403 = vmul.f32 %v1046, %v1402
    %vm1404 = vcmp.eq.f32.partialorder %v1046, inf
    %v1405 = vsel %vm1404, %v1046, %v1403
    %vm1406 = vcmp.eq.f32.partialorder %v1046, 0.0
    %v1407 = vand.u32 %v1046, 2147483648
    %v1408 = vsel %vm1406, %v1407, %v1405
    %v1409 = vrsqrt.pop %v1047
    %v1410 = vmul.f32 %v1409, %v1047
    %v1411 = vmul.f32 %v1410, %v1409
    %v1412 = vmul.f32 0.5, %v1411
    %v1413 = vsub.f32 1.5, %v1412
    %v1414 = vmul.f32 %v1409, %v1413
    %v1415 = vmul.f32 %v1047, %v1414
    %vm1416 = vcmp.eq.f32.partialorder %v1047, inf
    %v1417 = vsel %vm1416, %v1047, %v1415
    %vm1418 = vcmp.eq.f32.partialorder %v1047, 0.0
    %v1419 = vand.u32 %v1047, 2147483648
    %v1420 = vsel %vm1418, %v1419, %v1417
    %v1421 = vrsqrt.pop %v1048
    %v1422 = vmul.f32 %v1421, %v1048
    %v1423 = vmul.f32 %v1422, %v1421
    %v1424 = vmul.f32 0.5, %v1423
    %v1425 = vsub.f32 1.5, %v1424
    %v1426 = vmul.f32 %v1421, %v1425
    %v1427 = vmul.f32 %v1048, %v1426
    %vm1428 = vcmp.eq.f32.partialorder %v1048, inf
    %v1429 = vsel %vm1428, %v1048, %v1427
    %vm1430 = vcmp.eq.f32.partialorder %v1048, 0.0
    %v1431 = vand.u32 %v1048, 2147483648
    %v1432 = vsel %vm1430, %v1431, %v1429
    %s1433 = smul.f32 %s58, 0.5
    %v1434 = vstv %s1433
    %v1435 = vmul.f32 %v1434, %v1060
    %v1436 = vmul.f32 %v1434, %v1072
    %v1437 = vmul.f32 %v1434, %v1084
    %v1438 = vmul.f32 %v1434, %v1096
    %v1439 = vmul.f32 %v1434, %v1108
    %v1440 = vmul.f32 %v1434, %v1120
    %v1441 = vmul.f32 %v1434, %v1132
    %v1442 = vmul.f32 %v1434, %v1144
    %v1443 = vmul.f32 %v1434, %v1156
    %v1444 = vmul.f32 %v1434, %v1168
    %v1445 = vmul.f32 %v1434, %v1180
    %v1446 = vmul.f32 %v1434, %v1192
    %v1447 = vmul.f32 %v1434, %v1204
    %v1448 = vmul.f32 %v1434, %v1216
    %v1449 = vmul.f32 %v1434, %v1228
    %v1450 = vmul.f32 %v1434, %v1240
    %v1451 = vmul.f32 %v1434, %v1252
    %v1452 = vmul.f32 %v1434, %v1264
    %v1453 = vmul.f32 %v1434, %v1276
    %v1454 = vmul.f32 %v1434, %v1288
    %v1455 = vmul.f32 %v1434, %v1300
    %v1456 = vmul.f32 %v1434, %v1312
    %v1457 = vmul.f32 %v1434, %v1324
    %v1458 = vmul.f32 %v1434, %v1336
    %v1459 = vmul.f32 %v1434, %v1348
    %v1460 = vmul.f32 %v1434, %v1360
    %v1461 = vmul.f32 %v1434, %v1372
    %v1462 = vmul.f32 %v1434, %v1384
    %v1463 = vmul.f32 %v1434, %v1396
    %v1464 = vmul.f32 %v1434, %v1408
    %v1465 = vmul.f32 %v1434, %v1420
    %v1466 = vmul.f32 %v1434, %v1432
    %v1467 = vtanh.pop %v1435
    %v1468 = vtanh.pop %v1436
    %v1469 = vtanh.pop %v1437
    %v1470 = vtanh.pop %v1438
    %v1471 = vtanh.pop %v1439
    %v1472 = vtanh.pop %v1440
    %v1473 = vtanh.pop %v1441
    %v1474 = vtanh.pop %v1442
    %v1475 = vtanh.pop %v1443
    %v1476 = vtanh.pop %v1444
    %v1477 = vtanh.pop %v1445
    %v1478 = vtanh.pop %v1446
    %v1479 = vtanh.pop %v1447
    %v1480 = vtanh.pop %v1448
    %v1481 = vtanh.pop %v1449
    %v1482 = vtanh.pop %v1450
    %v1483 = vtanh.pop %v1451
    %v1484 = vtanh.pop %v1452
    %v1485 = vtanh.pop %v1453
    %v1486 = vtanh.pop %v1454
    %v1487 = vtanh.pop %v1455
    %v1488 = vtanh.pop %v1456
    %v1489 = vtanh.pop %v1457
    %v1490 = vtanh.pop %v1458
    %v1491 = vtanh.pop %v1459
    %v1492 = vtanh.pop %v1460
    %v1493 = vtanh.pop %v1461
    %v1494 = vtanh.pop %v1462
    %v1495 = vtanh.pop %v1463
    %v1496 = vtanh.pop %v1464
    %v1497 = vtanh.pop %v1465
    %v1498 = vtanh.pop %v1466
    %v1499 = vsub.f32 1.0, %v1467
    %v1500 = vsub.f32 1.0, %v1468
    %v1501 = vsub.f32 1.0, %v1469
    %v1502 = vsub.f32 1.0, %v1470
    %v1503 = vsub.f32 1.0, %v1471
    %v1504 = vsub.f32 1.0, %v1472
    %v1505 = vsub.f32 1.0, %v1473
    %v1506 = vsub.f32 1.0, %v1474
    %v1507 = vsub.f32 1.0, %v1475
    %v1508 = vsub.f32 1.0, %v1476
    %v1509 = vsub.f32 1.0, %v1477
    %v1510 = vsub.f32 1.0, %v1478
    %v1511 = vsub.f32 1.0, %v1479
    %v1512 = vsub.f32 1.0, %v1480
    %v1513 = vsub.f32 1.0, %v1481
    %v1514 = vsub.f32 1.0, %v1482
    %v1515 = vsub.f32 1.0, %v1483
    %v1516 = vsub.f32 1.0, %v1484
    %v1517 = vsub.f32 1.0, %v1485
    %v1518 = vsub.f32 1.0, %v1486
    %v1519 = vsub.f32 1.0, %v1487
    %v1520 = vsub.f32 1.0, %v1488
    %v1521 = vsub.f32 1.0, %v1489
    %v1522 = vsub.f32 1.0, %v1490
    %v1523 = vsub.f32 1.0, %v1491
    %v1524 = vsub.f32 1.0, %v1492
    %v1525 = vsub.f32 1.0, %v1493
    %v1526 = vsub.f32 1.0, %v1494
    %v1527 = vsub.f32 1.0, %v1495
    %v1528 = vsub.f32 1.0, %v1496
    %v1529 = vsub.f32 1.0, %v1497
    %v1530 = vsub.f32 1.0, %v1498
    %v1531 = vstv %s57
    %v1532 = vmul.f32 %v1499, %v1531
    %v1533 = vmul.f32 %v1500, %v1531
    %v1534 = vmul.f32 %v1501, %v1531
    %v1535 = vmul.f32 %v1502, %v1531
    %v1536 = vmul.f32 %v1503, %v1531
    %v1537 = vmul.f32 %v1504, %v1531
    %v1538 = vmul.f32 %v1505, %v1531
    %v1539 = vmul.f32 %v1506, %v1531
    %v1540 = vmul.f32 %v1507, %v1531
    %v1541 = vmul.f32 %v1508, %v1531
    %v1542 = vmul.f32 %v1509, %v1531
    %v1543 = vmul.f32 %v1510, %v1531
    %v1544 = vmul.f32 %v1511, %v1531
    %v1545 = vmul.f32 %v1512, %v1531
    %v1546 = vmul.f32 %v1513, %v1531
    %v1547 = vmul.f32 %v1514, %v1531
    %v1548 = vmul.f32 %v1515, %v1531
    %v1549 = vmul.f32 %v1516, %v1531
    %v1550 = vmul.f32 %v1517, %v1531
    %v1551 = vmul.f32 %v1518, %v1531
    %v1552 = vmul.f32 %v1519, %v1531
    %v1553 = vmul.f32 %v1520, %v1531
    %v1554 = vmul.f32 %v1521, %v1531
    %v1555 = vmul.f32 %v1522, %v1531
    %v1556 = vmul.f32 %v1523, %v1531
    %v1557 = vmul.f32 %v1524, %v1531
    %v1558 = vmul.f32 %v1525, %v1531
    %v1559 = vmul.f32 %v1526, %v1531
    %v1560 = vmul.f32 %v1527, %v1531
    %v1561 = vmul.f32 %v1528, %v1531
    %v1562 = vmul.f32 %v1529, %v1531
    %v1563 = vmul.f32 %v1530, %v1531
    %v1564 = vadd.f32 %v856, %v1532
    %v1565 = vadd.f32 %v857, %v1533
    %v1566 = vadd.f32 %v858, %v1534
    %v1567 = vadd.f32 %v859, %v1535
    %v1568 = vadd.f32 %v860, %v1536
    %v1569 = vadd.f32 %v861, %v1537
    %v1570 = vadd.f32 %v862, %v1538
    %v1571 = vadd.f32 %v863, %v1539
    %v1572 = vadd.f32 %v864, %v1540
    %v1573 = vadd.f32 %v865, %v1541
    %v1574 = vadd.f32 %v866, %v1542
    %v1575 = vadd.f32 %v867, %v1543
    %v1576 = vadd.f32 %v868, %v1544
    %v1577 = vadd.f32 %v869, %v1545
    %v1578 = vadd.f32 %v870, %v1546
    %v1579 = vadd.f32 %v871, %v1547
    %v1580 = vadd.f32 %v872, %v1548
    %v1581 = vadd.f32 %v873, %v1549
    %v1582 = vadd.f32 %v874, %v1550
    %v1583 = vadd.f32 %v875, %v1551
    %v1584 = vadd.f32 %v876, %v1552
    %v1585 = vadd.f32 %v877, %v1553
    %v1586 = vadd.f32 %v878, %v1554
    %v1587 = vadd.f32 %v879, %v1555
    %v1588 = vadd.f32 %v880, %v1556
    %v1589 = vadd.f32 %v881, %v1557
    %v1590 = vadd.f32 %v882, %v1558
    %v1591 = vadd.f32 %v883, %v1559
    %v1592 = vadd.f32 %v884, %v1560
    %v1593 = vadd.f32 %v885, %v1561
    %v1594 = vadd.f32 %v886, %v1562
    %v1595 = vadd.f32 %v887, %v1563
    %v1596 = vlaneseq
    %v1597 = vand.u32 %v1596, 127
    %vm1598 = vcmp.gt.s32.totalorder %v1597, 4294967295
    %v1599 = vstv %s60
    %vm1600 = vcmp.lt.s32.totalorder %v1597, %v1599
    %vm1601 = vmand %vm1598, %vm1600
    %v1602 = vstv %s59
    %v1603 = vmul.f32 %v1564, %v1602
    %v1604 = vmul.f32 %v1565, %v1602
    %v1605 = vmul.f32 %v1566, %v1602
    %v1606 = vmul.f32 %v1567, %v1602
    %v1607 = vmul.f32 %v1568, %v1602
    %v1608 = vmul.f32 %v1569, %v1602
    %v1609 = vmul.f32 %v1570, %v1602
    %v1610 = vmul.f32 %v1571, %v1602
    %v1611 = vmul.f32 %v1572, %v1602
    %v1612 = vmul.f32 %v1573, %v1602
    %v1613 = vmul.f32 %v1574, %v1602
    %v1614 = vmul.f32 %v1575, %v1602
    %v1615 = vmul.f32 %v1576, %v1602
    %v1616 = vmul.f32 %v1577, %v1602
    %v1617 = vmul.f32 %v1578, %v1602
    %v1618 = vmul.f32 %v1579, %v1602
    %v1619 = vmul.f32 %v1580, %v1602
    %v1620 = vmul.f32 %v1581, %v1602
    %v1621 = vmul.f32 %v1582, %v1602
    %v1622 = vmul.f32 %v1583, %v1602
    %v1623 = vmul.f32 %v1584, %v1602
    %v1624 = vmul.f32 %v1585, %v1602
    %v1625 = vmul.f32 %v1586, %v1602
    %v1626 = vmul.f32 %v1587, %v1602
    %v1627 = vmul.f32 %v1588, %v1602
    %v1628 = vmul.f32 %v1589, %v1602
    %v1629 = vmul.f32 %v1590, %v1602
    %v1630 = vmul.f32 %v1591, %v1602
    %v1631 = vmul.f32 %v1592, %v1602
    %v1632 = vmul.f32 %v1593, %v1602
    %v1633 = vmul.f32 %v1594, %v1602
    %v1634 = vmul.f32 %v1595, %v1602
    %v1635 = vsel %vm1601, %v1603, -1e+30
    %v1636 = vsel %vm1601, %v1604, -1e+30
    %v1637 = vsel %vm1601, %v1605, -1e+30
    %v1638 = vsel %vm1601, %v1606, -1e+30
    %v1639 = vsel %vm1601, %v1607, -1e+30
    %v1640 = vsel %vm1601, %v1608, -1e+30
    %v1641 = vsel %vm1601, %v1609, -1e+30
    %v1642 = vsel %vm1601, %v1610, -1e+30
    %v1643 = vsel %vm1601, %v1611, -1e+30
    %v1644 = vsel %vm1601, %v1612, -1e+30
    %v1645 = vsel %vm1601, %v1613, -1e+30
    %v1646 = vsel %vm1601, %v1614, -1e+30
    %v1647 = vsel %vm1601, %v1615, -1e+30
    %v1648 = vsel %vm1601, %v1616, -1e+30
    %v1649 = vsel %vm1601, %v1617, -1e+30
    %v1650 = vsel %vm1601, %v1618, -1e+30
    %v1651 = vsel %vm1601, %v1619, -1e+30
    %v1652 = vsel %vm1601, %v1620, -1e+30
    %v1653 = vsel %vm1601, %v1621, -1e+30
    %v1654 = vsel %vm1601, %v1622, -1e+30
    %v1655 = vsel %vm1601, %v1623, -1e+30
    %v1656 = vsel %vm1601, %v1624, -1e+30
    %v1657 = vsel %vm1601, %v1625, -1e+30
    %v1658 = vsel %vm1601, %v1626, -1e+30
    %v1659 = vsel %vm1601, %v1627, -1e+30
    %v1660 = vsel %vm1601, %v1628, -1e+30
    %v1661 = vsel %vm1601, %v1629, -1e+30
    %v1662 = vsel %vm1601, %v1630, -1e+30
    %v1663 = vsel %vm1601, %v1631, -1e+30
    %v1664 = vsel %vm1601, %v1632, -1e+30
    %v1665 = vsel %vm1601, %v1633, -1e+30
    %v1666 = vsel %vm1601, %v1634, -1e+30
    %1667 = vmax.xlane.f32.xlu0 %v1635
    %v1668 = vpop.xlane.xlu0 %1667
    %1669 = vmax.xlane.f32.xlu0 %v1636
    %v1670 = vpop.xlane.xlu0 %1669
    %1671 = vmax.xlane.f32.xlu0 %v1637
    %v1672 = vpop.xlane.xlu0 %1671
    %1673 = vmax.xlane.f32.xlu0 %v1638
    %v1674 = vpop.xlane.xlu0 %1673
    %1675 = vmax.xlane.f32.xlu0 %v1639
    %v1676 = vpop.xlane.xlu0 %1675
    %1677 = vmax.xlane.f32.xlu0 %v1640
    %v1678 = vpop.xlane.xlu0 %1677
    %1679 = vmax.xlane.f32.xlu0 %v1641
    %v1680 = vpop.xlane.xlu0 %1679
    %1681 = vmax.xlane.f32.xlu0 %v1642
    %v1682 = vpop.xlane.xlu0 %1681
    %1683 = vmax.xlane.f32.xlu0 %v1643
    %v1684 = vpop.xlane.xlu0 %1683
    %1685 = vmax.xlane.f32.xlu0 %v1644
    %v1686 = vpop.xlane.xlu0 %1685
    %1687 = vmax.xlane.f32.xlu0 %v1645
    %v1688 = vpop.xlane.xlu0 %1687
    %1689 = vmax.xlane.f32.xlu0 %v1646
    %v1690 = vpop.xlane.xlu0 %1689
    %1691 = vmax.xlane.f32.xlu0 %v1647
    %v1692 = vpop.xlane.xlu0 %1691
    %1693 = vmax.xlane.f32.xlu0 %v1648
    %v1694 = vpop.xlane.xlu0 %1693
    %1695 = vmax.xlane.f32.xlu0 %v1649
    %v1696 = vpop.xlane.xlu0 %1695
    %1697 = vmax.xlane.f32.xlu0 %v1650
    %v1698 = vpop.xlane.xlu0 %1697
    %1699 = vmax.xlane.f32.xlu0 %v1651
    %v1700 = vpop.xlane.xlu0 %1699
    %1701 = vmax.xlane.f32.xlu0 %v1652
    %v1702 = vpop.xlane.xlu0 %1701
    %1703 = vmax.xlane.f32.xlu0 %v1653
    %v1704 = vpop.xlane.xlu0 %1703
    %1705 = vmax.xlane.f32.xlu0 %v1654
    %v1706 = vpop.xlane.xlu0 %1705
    %1707 = vmax.xlane.f32.xlu0 %v1655
    %v1708 = vpop.xlane.xlu0 %1707
    %1709 = vmax.xlane.f32.xlu0 %v1656
    %v1710 = vpop.xlane.xlu0 %1709
    %1711 = vmax.xlane.f32.xlu0 %v1657
    %v1712 = vpop.xlane.xlu0 %1711
    %1713 = vmax.xlane.f32.xlu0 %v1658
    %v1714 = vpop.xlane.xlu0 %1713
    %1715 = vmax.xlane.f32.xlu0 %v1659
    %v1716 = vpop.xlane.xlu0 %1715
    %1717 = vmax.xlane.f32.xlu0 %v1660
    %v1718 = vpop.xlane.xlu0 %1717
    %1719 = vmax.xlane.f32.xlu0 %v1661
    %v1720 = vpop.xlane.xlu0 %1719
    %1721 = vmax.xlane.f32.xlu0 %v1662
    %v1722 = vpop.xlane.xlu0 %1721
    %1723 = vmax.xlane.f32.xlu0 %v1663
    %v1724 = vpop.xlane.xlu0 %1723
    %1725 = vmax.xlane.f32.xlu0 %v1664
    %v1726 = vpop.xlane.xlu0 %1725
    %1727 = vmax.xlane.f32.xlu0 %v1665
    %v1728 = vpop.xlane.xlu0 %1727
    %1729 = vmax.xlane.f32.xlu0 %v1666
    %v1730 = vpop.xlane.xlu0 %1729
    %v1731 = vsub.f32 %v1635, %v1668
    %v1732 = vsub.f32 %v1636, %v1670
    %v1733 = vsub.f32 %v1637, %v1672
    %v1734 = vsub.f32 %v1638, %v1674
    %v1735 = vsub.f32 %v1639, %v1676
    %v1736 = vsub.f32 %v1640, %v1678
    %v1737 = vsub.f32 %v1641, %v1680
    %v1738 = vsub.f32 %v1642, %v1682
    %v1739 = vsub.f32 %v1643, %v1684
    %v1740 = vsub.f32 %v1644, %v1686
    %v1741 = vsub.f32 %v1645, %v1688
    %v1742 = vsub.f32 %v1646, %v1690
    %v1743 = vsub.f32 %v1647, %v1692
    %v1744 = vsub.f32 %v1648, %v1694
    %v1745 = vsub.f32 %v1649, %v1696
    %v1746 = vsub.f32 %v1650, %v1698
    %v1747 = vsub.f32 %v1651, %v1700
    %v1748 = vsub.f32 %v1652, %v1702
    %v1749 = vsub.f32 %v1653, %v1704
    %v1750 = vsub.f32 %v1654, %v1706
    %v1751 = vsub.f32 %v1655, %v1708
    %v1752 = vsub.f32 %v1656, %v1710
    %v1753 = vsub.f32 %v1657, %v1712
    %v1754 = vsub.f32 %v1658, %v1714
    %v1755 = vsub.f32 %v1659, %v1716
    %v1756 = vsub.f32 %v1660, %v1718
    %v1757 = vsub.f32 %v1661, %v1720
    %v1758 = vsub.f32 %v1662, %v1722
    %v1759 = vsub.f32 %v1663, %v1724
    %v1760 = vsub.f32 %v1664, %v1726
    %v1761 = vsub.f32 %v1665, %v1728
    %v1762 = vsub.f32 %v1666, %v1730
    %v1763 = vmul.f32 %v1731, 1.442695
    %v1764 = vpow.pop %v1763
    %v1765 = vmul.f32 %v1732, 1.442695
    %v1766 = vpow.pop %v1765
    %v1767 = vmul.f32 %v1733, 1.442695
    %v1768 = vpow.pop %v1767
    %v1769 = vmul.f32 %v1734, 1.442695
    %v1770 = vpow.pop %v1769
    %v1771 = vmul.f32 %v1735, 1.442695
    %v1772 = vpow.pop %v1771
    %v1773 = vmul.f32 %v1736, 1.442695
    %v1774 = vpow.pop %v1773
    %v1775 = vmul.f32 %v1737, 1.442695
    %v1776 = vpow.pop %v1775
    %v1777 = vmul.f32 %v1738, 1.442695
    %v1778 = vpow.pop %v1777
    %v1779 = vmul.f32 %v1739, 1.442695
    %v1780 = vpow.pop %v1779
    %v1781 = vmul.f32 %v1740, 1.442695
    %v1782 = vpow.pop %v1781
    %v1783 = vmul.f32 %v1741, 1.442695
    %v1784 = vpow.pop %v1783
    %v1785 = vmul.f32 %v1742, 1.442695
    %v1786 = vpow.pop %v1785
    %v1787 = vmul.f32 %v1743, 1.442695
    %v1788 = vpow.pop %v1787
    %v1789 = vmul.f32 %v1744, 1.442695
    %v1790 = vpow.pop %v1789
    %v1791 = vmul.f32 %v1745, 1.442695
    %v1792 = vpow.pop %v1791
    %v1793 = vmul.f32 %v1746, 1.442695
    %v1794 = vpow.pop %v1793
    %v1795 = vmul.f32 %v1747, 1.442695
    %v1796 = vpow.pop %v1795
    %v1797 = vmul.f32 %v1748, 1.442695
    %v1798 = vpow.pop %v1797
    %v1799 = vmul.f32 %v1749, 1.442695
    %v1800 = vpow.pop %v1799
    %v1801 = vmul.f32 %v1750, 1.442695
    %v1802 = vpow.pop %v1801
    %v1803 = vmul.f32 %v1751, 1.442695
    %v1804 = vpow.pop %v1803
    %v1805 = vmul.f32 %v1752, 1.442695
    %v1806 = vpow.pop %v1805
    %v1807 = vmul.f32 %v1753, 1.442695
    %v1808 = vpow.pop %v1807
    %v1809 = vmul.f32 %v1754, 1.442695
    %v1810 = vpow.pop %v1809
    %v1811 = vmul.f32 %v1755, 1.442695
    %v1812 = vpow.pop %v1811
    %v1813 = vmul.f32 %v1756, 1.442695
    %v1814 = vpow.pop %v1813
    %v1815 = vmul.f32 %v1757, 1.442695
    %v1816 = vpow.pop %v1815
    %v1817 = vmul.f32 %v1758, 1.442695
    %v1818 = vpow.pop %v1817
    %v1819 = vmul.f32 %v1759, 1.442695
    %v1820 = vpow.pop %v1819
    %v1821 = vmul.f32 %v1760, 1.442695
    %v1822 = vpow.pop %v1821
    %v1823 = vmul.f32 %v1761, 1.442695
    %v1824 = vpow.pop %v1823
    %v1825 = vmul.f32 %v1762, 1.442695
    %v1826 = vpow.pop %v1825
    %v1827 = vsel %vm1601, %v1764, 0.0
    %v1828 = vsel %vm1601, %v1766, 0.0
    %v1829 = vsel %vm1601, %v1768, 0.0
    %v1830 = vsel %vm1601, %v1770, 0.0
    %v1831 = vsel %vm1601, %v1772, 0.0
    %v1832 = vsel %vm1601, %v1774, 0.0
    %v1833 = vsel %vm1601, %v1776, 0.0
    %v1834 = vsel %vm1601, %v1778, 0.0
    %v1835 = vsel %vm1601, %v1780, 0.0
    %v1836 = vsel %vm1601, %v1782, 0.0
    %v1837 = vsel %vm1601, %v1784, 0.0
    %v1838 = vsel %vm1601, %v1786, 0.0
    %v1839 = vsel %vm1601, %v1788, 0.0
    %v1840 = vsel %vm1601, %v1790, 0.0
    %v1841 = vsel %vm1601, %v1792, 0.0
    %v1842 = vsel %vm1601, %v1794, 0.0
    %v1843 = vsel %vm1601, %v1796, 0.0
    %v1844 = vsel %vm1601, %v1798, 0.0
    %v1845 = vsel %vm1601, %v1800, 0.0
    %v1846 = vsel %vm1601, %v1802, 0.0
    %v1847 = vsel %vm1601, %v1804, 0.0
    %v1848 = vsel %vm1601, %v1806, 0.0
    %v1849 = vsel %vm1601, %v1808, 0.0
    %v1850 = vsel %vm1601, %v1810, 0.0
    %v1851 = vsel %vm1601, %v1812, 0.0
    %v1852 = vsel %vm1601, %v1814, 0.0
    %v1853 = vsel %vm1601, %v1816, 0.0
    %v1854 = vsel %vm1601, %v1818, 0.0
    %v1855 = vsel %vm1601, %v1820, 0.0
    %v1856 = vsel %vm1601, %v1822, 0.0
    %v1857 = vsel %vm1601, %v1824, 0.0
    %v1858 = vsel %vm1601, %v1826, 0.0
    %1859 = vadd.xlane.f32.xlu0 %v1827
    %v1860 = vpop.xlane.xlu0 %1859
    %1861 = vadd.xlane.f32.xlu0 %v1828
    %v1862 = vpop.xlane.xlu0 %1861
    %1863 = vadd.xlane.f32.xlu0 %v1829
    %v1864 = vpop.xlane.xlu0 %1863
    %1865 = vadd.xlane.f32.xlu0 %v1830
    %v1866 = vpop.xlane.xlu0 %1865
    %1867 = vadd.xlane.f32.xlu0 %v1831
    %v1868 = vpop.xlane.xlu0 %1867
    %1869 = vadd.xlane.f32.xlu0 %v1832
    %v1870 = vpop.xlane.xlu0 %1869
    %1871 = vadd.xlane.f32.xlu0 %v1833
    %v1872 = vpop.xlane.xlu0 %1871
    %1873 = vadd.xlane.f32.xlu0 %v1834
    %v1874 = vpop.xlane.xlu0 %1873
    %1875 = vadd.xlane.f32.xlu0 %v1835
    %v1876 = vpop.xlane.xlu0 %1875
    %1877 = vadd.xlane.f32.xlu0 %v1836
    %v1878 = vpop.xlane.xlu0 %1877
    %1879 = vadd.xlane.f32.xlu0 %v1837
    %v1880 = vpop.xlane.xlu0 %1879
    %1881 = vadd.xlane.f32.xlu0 %v1838
    %v1882 = vpop.xlane.xlu0 %1881
    %1883 = vadd.xlane.f32.xlu0 %v1839
    %v1884 = vpop.xlane.xlu0 %1883
    %1885 = vadd.xlane.f32.xlu0 %v1840
    %v1886 = vpop.xlane.xlu0 %1885
    %1887 = vadd.xlane.f32.xlu0 %v1841
    %v1888 = vpop.xlane.xlu0 %1887
    %1889 = vadd.xlane.f32.xlu0 %v1842
    %v1890 = vpop.xlane.xlu0 %1889
    %1891 = vadd.xlane.f32.xlu0 %v1843
    %v1892 = vpop.xlane.xlu0 %1891
    %1893 = vadd.xlane.f32.xlu0 %v1844
    %v1894 = vpop.xlane.xlu0 %1893
    %1895 = vadd.xlane.f32.xlu0 %v1845
    %v1896 = vpop.xlane.xlu0 %1895
    %1897 = vadd.xlane.f32.xlu0 %v1846
    %v1898 = vpop.xlane.xlu0 %1897
    %1899 = vadd.xlane.f32.xlu0 %v1847
    %v1900 = vpop.xlane.xlu0 %1899
    %1901 = vadd.xlane.f32.xlu0 %v1848
    %v1902 = vpop.xlane.xlu0 %1901
    %1903 = vadd.xlane.f32.xlu0 %v1849
    %v1904 = vpop.xlane.xlu0 %1903
    %1905 = vadd.xlane.f32.xlu0 %v1850
    %v1906 = vpop.xlane.xlu0 %1905
    %1907 = vadd.xlane.f32.xlu0 %v1851
    %v1908 = vpop.xlane.xlu0 %1907
    %1909 = vadd.xlane.f32.xlu0 %v1852
    %v1910 = vpop.xlane.xlu0 %1909
    %1911 = vadd.xlane.f32.xlu0 %v1853
    %v1912 = vpop.xlane.xlu0 %1911
    %1913 = vadd.xlane.f32.xlu0 %v1854
    %v1914 = vpop.xlane.xlu0 %1913
    %1915 = vadd.xlane.f32.xlu0 %v1855
    %v1916 = vpop.xlane.xlu0 %1915
    %1917 = vadd.xlane.f32.xlu0 %v1856
    %v1918 = vpop.xlane.xlu0 %1917
    %1919 = vadd.xlane.f32.xlu0 %v1857
    %v1920 = vpop.xlane.xlu0 %1919
    %1921 = vadd.xlane.f32.xlu0 %v1858
    %v1922 = vpop.xlane.xlu0 %1921
    %v1923 = vmax.f32 %v1860, 1e-30
    %v1924 = vmax.f32 %v1862, 1e-30
    %v1925 = vmax.f32 %v1864, 1e-30
    %v1926 = vmax.f32 %v1866, 1e-30
    %v1927 = vmax.f32 %v1868, 1e-30
    %v1928 = vmax.f32 %v1870, 1e-30
    %v1929 = vmax.f32 %v1872, 1e-30
    %v1930 = vmax.f32 %v1874, 1e-30
    %v1931 = vmax.f32 %v1876, 1e-30
    %v1932 = vmax.f32 %v1878, 1e-30
    %v1933 = vmax.f32 %v1880, 1e-30
    %v1934 = vmax.f32 %v1882, 1e-30
    %v1935 = vmax.f32 %v1884, 1e-30
    %v1936 = vmax.f32 %v1886, 1e-30
    %v1937 = vmax.f32 %v1888, 1e-30
    %v1938 = vmax.f32 %v1890, 1e-30
    %v1939 = vmax.f32 %v1892, 1e-30
    %v1940 = vmax.f32 %v1894, 1e-30
    %v1941 = vmax.f32 %v1896, 1e-30
    %v1942 = vmax.f32 %v1898, 1e-30
    %v1943 = vmax.f32 %v1900, 1e-30
    %v1944 = vmax.f32 %v1902, 1e-30
    %v1945 = vmax.f32 %v1904, 1e-30
    %v1946 = vmax.f32 %v1906, 1e-30
    %v1947 = vmax.f32 %v1908, 1e-30
    %v1948 = vmax.f32 %v1910, 1e-30
    %v1949 = vmax.f32 %v1912, 1e-30
    %v1950 = vmax.f32 %v1914, 1e-30
    %v1951 = vmax.f32 %v1916, 1e-30
    %v1952 = vmax.f32 %v1918, 1e-30
    %v1953 = vmax.f32 %v1920, 1e-30
    %v1954 = vmax.f32 %v1922, 1e-30
    %v1955 = vrcp.pop %v1923
    %v1956 = vrcp.pop %v1924
    %v1957 = vrcp.pop %v1925
    %v1958 = vrcp.pop %v1926
    %v1959 = vrcp.pop %v1927
    %v1960 = vrcp.pop %v1928
    %v1961 = vrcp.pop %v1929
    %v1962 = vrcp.pop %v1930
    %v1963 = vrcp.pop %v1931
    %v1964 = vrcp.pop %v1932
    %v1965 = vrcp.pop %v1933
    %v1966 = vrcp.pop %v1934
    %v1967 = vrcp.pop %v1935
    %v1968 = vrcp.pop %v1936
    %v1969 = vrcp.pop %v1937
    %v1970 = vrcp.pop %v1938
    %v1971 = vrcp.pop %v1939
    %v1972 = vrcp.pop %v1940
    %v1973 = vrcp.pop %v1941
    %v1974 = vrcp.pop %v1942
    %v1975 = vrcp.pop %v1943
    %v1976 = vrcp.pop %v1944
    %v1977 = vrcp.pop %v1945
    %v1978 = vrcp.pop %v1946
    %v1979 = vrcp.pop %v1947
    %v1980 = vrcp.pop %v1948
    %v1981 = vrcp.pop %v1949
    %v1982 = vrcp.pop %v1950
    %v1983 = vrcp.pop %v1951
    %v1984 = vrcp.pop %v1952
    %v1985 = vrcp.pop %v1953
    %v1986 = vrcp.pop %v1954
    %v1987 = vmul.f32 %v1827, %v1955
    %v1988 = vmul.f32 %v1828, %v1956
    %v1989 = vmul.f32 %v1829, %v1957
    %v1990 = vmul.f32 %v1830, %v1958
    %v1991 = vmul.f32 %v1831, %v1959
    %v1992 = vmul.f32 %v1832, %v1960
    %v1993 = vmul.f32 %v1833, %v1961
    %v1994 = vmul.f32 %v1834, %v1962
    %v1995 = vmul.f32 %v1835, %v1963
    %v1996 = vmul.f32 %v1836, %v1964
    %v1997 = vmul.f32 %v1837, %v1965
    %v1998 = vmul.f32 %v1838, %v1966
    %v1999 = vmul.f32 %v1839, %v1967
    %v2000 = vmul.f32 %v1840, %v1968
    %v2001 = vmul.f32 %v1841, %v1969
    %v2002 = vmul.f32 %v1842, %v1970
    %v2003 = vmul.f32 %v1843, %v1971
    %v2004 = vmul.f32 %v1844, %v1972
    %v2005 = vmul.f32 %v1845, %v1973
    %v2006 = vmul.f32 %v1846, %v1974
    %v2007 = vmul.f32 %v1847, %v1975
    %v2008 = vmul.f32 %v1848, %v1976
    %v2009 = vmul.f32 %v1849, %v1977
    %v2010 = vmul.f32 %v1850, %v1978
    %v2011 = vmul.f32 %v1851, %v1979
    %v2012 = vmul.f32 %v1852, %v1980
    %v2013 = vmul.f32 %v1853, %v1981
    %v2014 = vmul.f32 %v1854, %v1982
    %v2015 = vmul.f32 %v1855, %v1983
    %v2016 = vmul.f32 %v1856, %v1984
    %v2017 = vmul.f32 %v1857, %v1985
    %v2018 = vmul.f32 %v1858, %v1986
    %v2019 = vsel %vm1601, %v1564, 0.0
    %v2020 = vsel %vm1601, %v1565, 0.0
    %v2021 = vsel %vm1601, %v1566, 0.0
    %v2022 = vsel %vm1601, %v1567, 0.0
    %v2023 = vsel %vm1601, %v1568, 0.0
    %v2024 = vsel %vm1601, %v1569, 0.0
    %v2025 = vsel %vm1601, %v1570, 0.0
    %v2026 = vsel %vm1601, %v1571, 0.0
    %v2027 = vsel %vm1601, %v1572, 0.0
    %v2028 = vsel %vm1601, %v1573, 0.0
    %v2029 = vsel %vm1601, %v1574, 0.0
    %v2030 = vsel %vm1601, %v1575, 0.0
    %v2031 = vsel %vm1601, %v1576, 0.0
    %v2032 = vsel %vm1601, %v1577, 0.0
    %v2033 = vsel %vm1601, %v1578, 0.0
    %v2034 = vsel %vm1601, %v1579, 0.0
    %v2035 = vsel %vm1601, %v1580, 0.0
    %v2036 = vsel %vm1601, %v1581, 0.0
    %v2037 = vsel %vm1601, %v1582, 0.0
    %v2038 = vsel %vm1601, %v1583, 0.0
    %v2039 = vsel %vm1601, %v1584, 0.0
    %v2040 = vsel %vm1601, %v1585, 0.0
    %v2041 = vsel %vm1601, %v1586, 0.0
    %v2042 = vsel %vm1601, %v1587, 0.0
    %v2043 = vsel %vm1601, %v1588, 0.0
    %v2044 = vsel %vm1601, %v1589, 0.0
    %v2045 = vsel %vm1601, %v1590, 0.0
    %v2046 = vsel %vm1601, %v1591, 0.0
    %v2047 = vsel %vm1601, %v1592, 0.0
    %v2048 = vsel %vm1601, %v1593, 0.0
    %v2049 = vsel %vm1601, %v1594, 0.0
    %v2050 = vsel %vm1601, %v1595, 0.0
    %v2051 = vmul.f32 %v2019, %v1987
    %v2052 = vmul.f32 %v2020, %v1988
    %v2053 = vmul.f32 %v2021, %v1989
    %v2054 = vmul.f32 %v2022, %v1990
    %v2055 = vmul.f32 %v2023, %v1991
    %v2056 = vmul.f32 %v2024, %v1992
    %v2057 = vmul.f32 %v2025, %v1993
    %v2058 = vmul.f32 %v2026, %v1994
    %v2059 = vmul.f32 %v2027, %v1995
    %v2060 = vmul.f32 %v2028, %v1996
    %v2061 = vmul.f32 %v2029, %v1997
    %v2062 = vmul.f32 %v2030, %v1998
    %v2063 = vmul.f32 %v2031, %v1999
    %v2064 = vmul.f32 %v2032, %v2000
    %v2065 = vmul.f32 %v2033, %v2001
    %v2066 = vmul.f32 %v2034, %v2002
    %v2067 = vmul.f32 %v2035, %v2003
    %v2068 = vmul.f32 %v2036, %v2004
    %v2069 = vmul.f32 %v2037, %v2005
    %v2070 = vmul.f32 %v2038, %v2006
    %v2071 = vmul.f32 %v2039, %v2007
    %v2072 = vmul.f32 %v2040, %v2008
    %v2073 = vmul.f32 %v2041, %v2009
    %v2074 = vmul.f32 %v2042, %v2010
    %v2075 = vmul.f32 %v2043, %v2011
    %v2076 = vmul.f32 %v2044, %v2012
    %v2077 = vmul.f32 %v2045, %v2013
    %v2078 = vmul.f32 %v2046, %v2014
    %v2079 = vmul.f32 %v2047, %v2015
    %v2080 = vmul.f32 %v2048, %v2016
    %v2081 = vmul.f32 %v2049, %v2017
    %v2082 = vmul.f32 %v2050, %v2018
    %2083 = vadd.xlane.f32.xlu0 %v2051
    %v2084 = vpop.xlane.xlu0 %2083
    %2085 = vadd.xlane.f32.xlu0 %v2052
    %v2086 = vpop.xlane.xlu0 %2085
    %2087 = vadd.xlane.f32.xlu0 %v2053
    %v2088 = vpop.xlane.xlu0 %2087
    %2089 = vadd.xlane.f32.xlu0 %v2054
    %v2090 = vpop.xlane.xlu0 %2089
    %2091 = vadd.xlane.f32.xlu0 %v2055
    %v2092 = vpop.xlane.xlu0 %2091
    %2093 = vadd.xlane.f32.xlu0 %v2056
    %v2094 = vpop.xlane.xlu0 %2093
    %2095 = vadd.xlane.f32.xlu0 %v2057
    %v2096 = vpop.xlane.xlu0 %2095
    %2097 = vadd.xlane.f32.xlu0 %v2058
    %v2098 = vpop.xlane.xlu0 %2097
    %2099 = vadd.xlane.f32.xlu0 %v2059
    %v2100 = vpop.xlane.xlu0 %2099
    %2101 = vadd.xlane.f32.xlu0 %v2060
    %v2102 = vpop.xlane.xlu0 %2101
    %2103 = vadd.xlane.f32.xlu0 %v2061
    %v2104 = vpop.xlane.xlu0 %2103
    %2105 = vadd.xlane.f32.xlu0 %v2062
    %v2106 = vpop.xlane.xlu0 %2105
    %2107 = vadd.xlane.f32.xlu0 %v2063
    %v2108 = vpop.xlane.xlu0 %2107
    %2109 = vadd.xlane.f32.xlu0 %v2064
    %v2110 = vpop.xlane.xlu0 %2109
    %2111 = vadd.xlane.f32.xlu0 %v2065
    %v2112 = vpop.xlane.xlu0 %2111
    %2113 = vadd.xlane.f32.xlu0 %v2066
    %v2114 = vpop.xlane.xlu0 %2113
    %2115 = vadd.xlane.f32.xlu0 %v2067
    %v2116 = vpop.xlane.xlu0 %2115
    %2117 = vadd.xlane.f32.xlu0 %v2068
    %v2118 = vpop.xlane.xlu0 %2117
    %2119 = vadd.xlane.f32.xlu0 %v2069
    %v2120 = vpop.xlane.xlu0 %2119
    %2121 = vadd.xlane.f32.xlu0 %v2070
    %v2122 = vpop.xlane.xlu0 %2121
    %2123 = vadd.xlane.f32.xlu0 %v2071
    %v2124 = vpop.xlane.xlu0 %2123
    %2125 = vadd.xlane.f32.xlu0 %v2072
    %v2126 = vpop.xlane.xlu0 %2125
    %2127 = vadd.xlane.f32.xlu0 %v2073
    %v2128 = vpop.xlane.xlu0 %2127
    %2129 = vadd.xlane.f32.xlu0 %v2074
    %v2130 = vpop.xlane.xlu0 %2129
    %2131 = vadd.xlane.f32.xlu0 %v2075
    %v2132 = vpop.xlane.xlu0 %2131
    %2133 = vadd.xlane.f32.xlu0 %v2076
    %v2134 = vpop.xlane.xlu0 %2133
    %2135 = vadd.xlane.f32.xlu0 %v2077
    %v2136 = vpop.xlane.xlu0 %2135
    %2137 = vadd.xlane.f32.xlu0 %v2078
    %v2138 = vpop.xlane.xlu0 %2137
    %2139 = vadd.xlane.f32.xlu0 %v2079
    %v2140 = vpop.xlane.xlu0 %2139
    %2141 = vadd.xlane.f32.xlu0 %v2080
    %v2142 = vpop.xlane.xlu0 %2141
    %2143 = vadd.xlane.f32.xlu0 %v2081
    %v2144 = vpop.xlane.xlu0 %2143
    %2145 = vadd.xlane.f32.xlu0 %v2082
    %v2146 = vpop.xlane.xlu0 %2145
    %vm2147 = vcmp.eq.s32.totalorder %v1597, 0
    %v2148 = vsel %vm2147, %v2084, 0.0
    %v2149 = vsel %vm2147, %v2086, 0.0
    %v2150 = vsel %vm2147, %v2088, 0.0
    %v2151 = vsel %vm2147, %v2090, 0.0
    %v2152 = vsel %vm2147, %v2092, 0.0
    %v2153 = vsel %vm2147, %v2094, 0.0
    %v2154 = vsel %vm2147, %v2096, 0.0
    %v2155 = vsel %vm2147, %v2098, 0.0
    %v2156 = vsel %vm2147, %v2100, 0.0
    %v2157 = vsel %vm2147, %v2102, 0.0
    %v2158 = vsel %vm2147, %v2104, 0.0
    %v2159 = vsel %vm2147, %v2106, 0.0
    %v2160 = vsel %vm2147, %v2108, 0.0
    %v2161 = vsel %vm2147, %v2110, 0.0
    %v2162 = vsel %vm2147, %v2112, 0.0
    %v2163 = vsel %vm2147, %v2114, 0.0
    %v2164 = vsel %vm2147, %v2116, 0.0
    %v2165 = vsel %vm2147, %v2118, 0.0
    %v2166 = vsel %vm2147, %v2120, 0.0
    %v2167 = vsel %vm2147, %v2122, 0.0
    %v2168 = vsel %vm2147, %v2124, 0.0
    %v2169 = vsel %vm2147, %v2126, 0.0
    %v2170 = vsel %vm2147, %v2128, 0.0
    %v2171 = vsel %vm2147, %v2130, 0.0
    %v2172 = vsel %vm2147, %v2132, 0.0
    %v2173 = vsel %vm2147, %v2134, 0.0
    %v2174 = vsel %vm2147, %v2136, 0.0
    %v2175 = vsel %vm2147, %v2138, 0.0
    %v2176 = vsel %vm2147, %v2140, 0.0
    %v2177 = vsel %vm2147, %v2142, 0.0
    %v2178 = vsel %vm2147, %v2144, 0.0
    %v2179 = vsel %vm2147, %v2146, 0.0
    %vm2180 = vcmask 64512
    %2181 = vst.msk [vmem:[%s5] sm:$0xff] %vm2180, %v2148
    %2182 = vst.msk [vmem:[%s5 + $0x8] sm:$0xff] %vm2180, %v2149
    %2183 = vst.msk [vmem:[%s5 + $0x10] sm:$0xff] %vm2180, %v2150
    %2184 = vst.msk [vmem:[%s5 + $0x18] sm:$0xff] %vm2180, %v2151
    %2185 = vst.msk [vmem:[%s5 + $0x20] sm:$0xff] %vm2180, %v2152
    %2186 = vst.msk [vmem:[%s5 + $0x28] sm:$0xff] %vm2180, %v2153
    %2187 = vst.msk [vmem:[%s5 + $0x30] sm:$0xff] %vm2180, %v2154
    %2188 = vst.msk [vmem:[%s5 + $0x38] sm:$0xff] %vm2180, %v2155
    %2189 = vst.msk [vmem:[%s5 + $0x40] sm:$0xff] %vm2180, %v2156
    %2190 = vst.msk [vmem:[%s5 + $0x48] sm:$0xff] %vm2180, %v2157
    %2191 = vst.msk [vmem:[%s5 + $0x50] sm:$0xff] %vm2180, %v2158
    %2192 = vst.msk [vmem:[%s5 + $0x58] sm:$0xff] %vm2180, %v2159
    %2193 = vst.msk [vmem:[%s5 + $0x60] sm:$0xff] %vm2180, %v2160
    %2194 = vst.msk [vmem:[%s5 + $0x68] sm:$0xff] %vm2180, %v2161
    %2195 = vst.msk [vmem:[%s5 + $0x70] sm:$0xff] %vm2180, %v2162
    %2196 = vst.msk [vmem:[%s5 + $0x78] sm:$0xff] %vm2180, %v2163
    %2197 = vst.msk [vmem:[%s5 + $0x80] sm:$0xff] %vm2180, %v2164
    %2198 = vst.msk [vmem:[%s5 + $0x88] sm:$0xff] %vm2180, %v2165
    %2199 = vst.msk [vmem:[%s5 + $0x90] sm:$0xff] %vm2180, %v2166
    %2200 = vst.msk [vmem:[%s5 + $0x98] sm:$0xff] %vm2180, %v2167
    %2201 = vst.msk [vmem:[%s5 + $0xa0] sm:$0xff] %vm2180, %v2168
    %2202 = vst.msk [vmem:[%s5 + $0xa8] sm:$0xff] %vm2180, %v2169
    %2203 = vst.msk [vmem:[%s5 + $0xb0] sm:$0xff] %vm2180, %v2170
    %2204 = vst.msk [vmem:[%s5 + $0xb8] sm:$0xff] %vm2180, %v2171
    %2205 = vst.msk [vmem:[%s5 + $0xc0] sm:$0xff] %vm2180, %v2172
    %2206 = vst.msk [vmem:[%s5 + $0xc8] sm:$0xff] %vm2180, %v2173
    %2207 = vst.msk [vmem:[%s5 + $0xd0] sm:$0xff] %vm2180, %v2174
    %2208 = vst.msk [vmem:[%s5 + $0xd8] sm:$0xff] %vm2180, %v2175
    %2209 = vst.msk [vmem:[%s5 + $0xe0] sm:$0xff] %vm2180, %v2176
    %2210 = vst.msk [vmem:[%s5 + $0xe8] sm:$0xff] %vm2180, %v2177
    %2211 = vst.msk [vmem:[%s5 + $0xf0] sm:$0xff] %vm2180, %v2178
    %2212 = vst.msk [vmem:[%s5 + $0xf8] sm:$0xff] %vm2180, %v2179
    // Predicated region
    $region22: #{tpu_custom_call.1} parent=1 // pred_check
      _
    $region23: #{tpu_custom_call.1} parent=1 // pred_check_branch
      %2214 = sbr.rel (0) target = $region25
    $region24: #{tpu_custom_call.1} parent=1 // pred_region
      _
    $region25: #{tpu_custom_call.1} parent=1 // pred_fallthru
      _
    // Predicated region
    $region26: #{tpu_custom_call.1} parent=1 // pred_check
      _
    $region27: #{tpu_custom_call.1} parent=1 // pred_check_branch
      %2216 = sbr.rel (0) target = $region29
    $region28: #{tpu_custom_call.1} parent=1 // pred_region
      _
    $region29: #{tpu_custom_call.1} parent=1 // pred_fallthru
      _
    %2217 = vsyncpa [#allocation6], 1
    %2218 = vsyncpa [#allocation8], 1

</llo_original>
